<compile_context>
chip_gen: v7x
topology: tpu7x:2x2x1
jax: 0.10.0
libtpu: 0.0.40
codegen_flags: <defaults>
</compile_context>

<pallas_src>
import functools

import numpy as np
import jax
import jax.numpy as jnp
from jax import lax
from jax.experimental import pallas as pl
from jax.experimental.pallas import tpu as pltpu

N_FFT = 512                  # module default n_fft=512
HOP = N_FFT // 2             # torchaudio default hop_length = n_fft // 2 = 256
N_FREQ = N_FFT // 2 + 1      # onesided=True -> 257 real bins
N_PAD = 384                  # 3 * 128 lanes (zero columns 257..383)
EPS = 1e-6
TILE_R_MAX = 256             # hop rows per grid step (multiple of 8)


def _round_up(x, m):
    return (x + m - 1) // m * m


# ---------------------------------------------------------------------------
# Windowed DFT weights, built once with numpy.  Layout (N_FFT, 2*N_PAD):
#   rows [0:256)   -> contribution of a hop row as the FIRST  half of a frame
#   rows [256:512) -> contribution of a hop row as the SECOND half of a frame
#   cols [0:384)   -> cos (real part),  cols [384:768) -> sin (imag part)
#   cols 257..383 and 641..767 are zero padding (lane-dense MXU, exact sums).
# ---------------------------------------------------------------------------
def _build_windowed_dft():
    n = np.arange(N_FFT, dtype=np.float64)
    f = np.arange(N_FREQ, dtype=np.float64)
    window = 0.5 * (1.0 - np.cos(2.0 * np.pi * n / N_FFT))   # periodic Hann
    ang = 2.0 * np.pi * np.outer(n, f) / N_FFT
    w = np.zeros((N_FFT, 2 * N_PAD), dtype=np.float32)
    w[:, :N_FREQ] = (window[:, None] * np.cos(ang)).astype(np.float32)
    w[:, N_PAD:N_PAD + N_FREQ] = (window[:, None] * np.sin(ang)).astype(np.float32)
    return w


_W = _build_windowed_dft()


# ---------------------------------------------------------------------------
# Fused kernel: framing (via hop-row split) + windowed DFT (MXU) + |X|^2 +
# 5-sum accumulation; finalize -> normalized MSE scalar.
# ---------------------------------------------------------------------------
def _fused_spec_loss_kernel(ha_ref, hb_ref, w_ref, out_ref, acc_ref, carry_ref,
                            *, n_frames, n_real):
    b = pl.program_id(0)
    j = pl.program_id(1)

    @pl.when((b == 0) & (j == 0))
    def _init_acc():
        for k in range(5):
            acc_ref[k] = jnp.float32(0.0)

    @pl.when(j == 0)
    def _reset_carry():
        carry_ref[...] = jnp.zeros_like(carry_ref)

    ha = ha_ref[0]                       # (tile_r, HOP)   hop rows, output wav
    hb = hb_ref[0]                       # (tile_r, HOP)   hop rows, target wav
    w0 = w_ref[0:HOP, :]                 # (HOP, 2*N_PAD)  first-half weights
    w1 = w_ref[HOP:, :]                  # (HOP, 2*N_PAD)  second-half weights

    # Per-hop-row partial windowed DFTs on the MXU.
    # (Default matmul precision; pass precision=lax.Precision.HIGHEST for
    #  bit-fidelity to torch.stft at higher MXU cost.)
    g0a = jnp.dot(ha, w0, preferred_element_type=jnp.float32)
    g1a = jnp.dot(ha, w1, preferred_element_type=jnp.float32)
    g0b = jnp.dot(hb, w0, preferred_element_type=jnp.float32)
    g1b = jnp.dot(hb, w1, preferred_element_type=jnp.float32)

    # Local row l holds hop row (j*tile_r + l).  Frame g = j*tile_r + l - 1
    # needs G0[row g] + G1[row g+1]  -> shift G0 down one row; the previous
    # tile's last G0 row enters through the VMEM carry (sequential grid).
    carry = carry_ref[...]               # (2, 2*N_PAD): row 0 = a, row 1 = b
    da = jnp.concatenate([carry[0:1, :], g0a[:-1, :]], axis=0) + g1a
    db = jnp.concatenate([carry[1:2, :], g0b[:-1, :]], axis=0) + g1b
    carry_ref[...] = jnp.concatenate([g0a[-1:, :], g0b[-1:, :]], axis=0)

    re_a = da[:, :N_PAD]
    im_a = da[:, N_PAD:]
    re_b = db[:, :N_PAD]
    im_b = db[:, N_PAD:]
    pa = re_a * re_a + im_a * im_a       # power=2 spectrogram tile (output)
    pb = re_b * re_b + im_b * im_b       # power=2 spectrogram tile (target)

    # Mask rows that are not real frames: g < 0 (tile-boundary row at j == 0,
    # also isolates batches) and g >= n_frames (zero-row / overhang padding).
    # Zero-padded frequency lanes already contribute exactly 0.
    tile_r = pa.shape[0]
    g = lax.broadcasted_iota(jnp.int32, (tile_r, 1), 0) + (j * tile_r - 1)
    valid = (g >= 0) & (g < n_frames)
    pa = jnp.where(valid, pa, 0.0)
    pb = jnp.where(valid, pb, 0.0)

    acc_ref[0] += jnp.sum(pa)
    acc_ref[1] += jnp.sum(pb)
    acc_ref[2] += jnp.sum(pa * pa)
    acc_ref[3] += jnp.sum(pb * pb)
    acc_ref[4] += jnp.sum(pa * pb)

    @pl.when((b == pl.num_programs(0) - 1) & (j == pl.num_programs(1) - 1))
    def _finalize():
        n = jnp.float32(n_real)
        sa = acc_ref[0]
        sb = acc_ref[1]
        saa = acc_ref[2]
        sbb = acc_ref[3]
        sab = acc_ref[4]

        mean_a = sa / n
        mean_b = sb / n
        css_a = saa - n * mean_a * mean_a          # sum (a - mean_a)^2
        css_b = sbb - n * mean_b * mean_b          # sum (b - mean_b)^2
        ccross = sab - n * mean_a * mean_b         # sum (a - mean_a)(b - mean_b)

        # torch.std() default is unbiased (ddof=1); loss uses (std + eps).
        da_ = jnp.sqrt(css_a / (n - 1.0)) + EPS
        db_ = jnp.sqrt(css_b / (n - 1.0)) + EPS

        mse = (css_a / (da_ * da_)
               - 2.0 * ccross / (da_ * db_)
               + css_b / (db_ * db_)) / n
        out_ref[0, 0] = mse


# ---------------------------------------------------------------------------
# Wrapper glue (plain JAX): reflect pad + reshape into non-overlapping hop rows.
# ---------------------------------------------------------------------------
def _hop_rows(x):
    """x: (B, T) -> hop rows (B, n_frames + 1, HOP), n_frames."""
    B, T = x.shape
    pad = N_FFT // 2
    xp = jnp.pad(x, ((0, 0), (pad, pad)), mode="reflect")
    n_frames = T // HOP + 1
    n_hop = n_frames + 1
    xp = xp[:, : n_hop * HOP]
    return xp.reshape(B, n_hop, HOP), n_frames


def spectrogram_loss(output, target):
    ha, n_frames = _hop_rows(output.astype(jnp.float32))
    hb, _ = _hop_rows(target.astype(jnp.float32))
    B, n_hop, _ = ha.shape

    tile_r = min(TILE_R_MAX, _round_up(n_hop, 8))
    n_hop_pad = _round_up(n_hop, tile_r)
    if n_hop_pad != n_hop:
        padw = ((0, 0), (0, n_hop_pad - n_hop), (0, 0))
        ha = jnp.pad(ha, padw)             # zero hop rows -> masked frames
        hb = jnp.pad(hb, padw)
    num_row_tiles = n_hop_pad // tile_r
    n_real = B * n_frames * N_FREQ         # real spectrogram element count

    w = jnp.asarray(_W)

    kernel = functools.partial(_fused_spec_loss_kernel,
                               n_frames=n_frames, n_real=n_real)
    loss = pl.pallas_call(
        kernel,
        out_shape=jax.ShapeDtypeStruct((1, 1), jnp.float32),
        grid_spec=pltpu.PrefetchScalarGridSpec(
            num_scalar_prefetch=0,
            grid=(B, num_row_tiles),
            in_specs=[
                pl.BlockSpec((1, tile_r, HOP), lambda b, j: (b, j, 0)),   # hop rows (out)
                pl.BlockSpec((1, tile_r, HOP), lambda b, j: (b, j, 0)),   # hop rows (tgt)
                pl.BlockSpec((N_FFT, 2 * N_PAD), lambda b, j: (0, 0)),    # DFT weights (resident)
            ],
            out_specs=pl.BlockSpec(memory_space=pltpu.SMEM),
            scratch_shapes=[
                pltpu.SMEM((8,), jnp.float32),               # 5 global-sum accumulators
                pltpu.VMEM((2, 2 * N_PAD), jnp.float32),     # G0 carry (a, b) across tiles
            ],
        ),
        compiler_params=pltpu.CompilerParams(
            # Both axes carry state (accumulators / carry) -> sequential.
            dimension_semantics=("arbitrary", "arbitrary"),
            # Comfortable on v5e/v6e (128 MiB) and v7x (64 MiB physical).
            vmem_limit_bytes=32 * 1024 * 1024,
        ),
    )(ha, hb, w)
    return loss[0, 0]


# ---------------------------------------------------------------------------
# Pure-JAX reference (independent framing path) for a sanity check.
# ---------------------------------------------------------------------------
def _reference_loss(output, target):
    def spec(x):
        B, T = x.shape
        pad = N_FFT // 2
        xp = jnp.pad(x, ((0, 0), (pad, pad)), mode="reflect")
        nfr = T // HOP + 1
        idx = jnp.arange(nfr)[:, None] * HOP + jnp.arange(N_FFT)[None, :]
        frames = xp[:, idx]                                   # (B, nfr, N_FFT)
        n = jnp.arange(N_FFT, dtype=jnp.float32)
        f = jnp.arange(N_FREQ, dtype=jnp.float32)
        win = 0.5 * (1.0 - jnp.cos(2.0 * jnp.pi * n / N_FFT))
        ang = 2.0 * jnp.pi * n[:, None] * f[None, :] / N_FFT
        fw = frames * win[None, None, :]
        re = jnp.einsum("bfn,nk->bfk", fw, jnp.cos(ang))
        im = jnp.einsum("bfn,nk->bfk", fw, jnp.sin(ang))
        return re * re + im * im
    sa = spec(output)
    sb = spec(target)
    na = (sa - sa.mean()) / (sa.std(ddof=1) + EPS)
    nb = (sb - sb.mean()) / (sb.std(ddof=1) + EPS)
    return jnp.mean((na - nb) ** 2)


# ---------------------------------------------------------------------------
if __name__ == "__main__":
    key = jax.random.PRNGKey(0)
    k1, k2 = jax.random.split(key)
    B, T = 2, 2048   # 2 waveforms of 2048 samples -> 9 frames each, 257 bins
    output = jax.random.normal(k1, (B, T), dtype=jnp.float32)
    target = jax.random.normal(k2, (B, T), dtype=jnp.float32)

    loss = jax.jit(spectrogram_loss)(output, target)
    loss = jax.block_until_ready(loss)

    ref = float(jax.block_until_ready(_reference_loss(output, target)))
    got = float(loss)
    assert abs(got - ref) <= 1e-3 + 5e-2 * abs(ref), (got, ref)

    print("KERNEL_OK")
</pallas_src>

<mosaic_0001>
module attributes {stable_mosaic.version = 11 : i64} {
  func.func @_fused_spec_loss_kernel(%arg0: i32, %arg1: i32, %arg2: memref<1x16x256xf32, #tpu.memory_space<vmem>>, %arg3: memref<1x16x256xf32, #tpu.memory_space<vmem>>, %arg4: memref<512x768xf32, #tpu.memory_space<vmem>>, %arg5: memref<1x1xf32, #tpu.memory_space<smem>>, %arg6: memref<8xf32, #tpu.memory_space<smem>>, %arg7: memref<2x768xf32, #tpu.memory_space<vmem>>) attributes {dimension_semantics = [#tpu.dimension_semantics<arbitrary>, #tpu.dimension_semantics<arbitrary>], iteration_bounds = array<i64: 2, 1>, scalar_prefetch = 0 : i64, scratch_operands = 2 : i64, tpu.core_type = #tpu.core_type<tc>, window_params = [{transform_indices = @transform_0, window_bounds = array<i64: 1, 16, 256>}, {transform_indices = @transform_1, window_bounds = array<i64: 1, 16, 256>}, {pipeline_mode = #tpu.pipeline_mode<synchronous>, transform_indices = @transform_2, window_bounds = array<i64: 512, 768>}, {transform_indices = @transform_3, window_bounds = array<i64: 1, 1>}]} {
    %c0_i32 = arith.constant 0 : i32
    %0 = arith.cmpi eq, %arg0, %c0_i32 : i32
    %c0_i32_0 = arith.constant 0 : i32
    %1 = arith.cmpi eq, %arg1, %c0_i32_0 : i32
    %2 = arith.andi %0, %1 : i1
    %3 = arith.extui %2 : i1 to i32
    %c0_i32_1 = arith.constant 0 : i32
    %4 = arith.cmpi ne, %3, %c0_i32_1 : i32
    scf.if %4 {
      %cst_36 = arith.constant 0.000000e+00 : f32
      %c0_37 = arith.constant 0 : index
      %102 = memref.load %arg6[%c0_37] : memref<8xf32, #tpu.memory_space<smem>>
      memref.store %cst_36, %arg6[%c0_37] : memref<8xf32, #tpu.memory_space<smem>>
      %cst_38 = arith.constant 0.000000e+00 : f32
      %c1_39 = arith.constant 1 : index
      %103 = memref.load %arg6[%c1_39] : memref<8xf32, #tpu.memory_space<smem>>
      memref.store %cst_38, %arg6[%c1_39] : memref<8xf32, #tpu.memory_space<smem>>
      %cst_40 = arith.constant 0.000000e+00 : f32
      %c2_41 = arith.constant 2 : index
      %104 = memref.load %arg6[%c2_41] : memref<8xf32, #tpu.memory_space<smem>>
      memref.store %cst_40, %arg6[%c2_41] : memref<8xf32, #tpu.memory_space<smem>>
      %cst_42 = arith.constant 0.000000e+00 : f32
      %c3_43 = arith.constant 3 : index
      %105 = memref.load %arg6[%c3_43] : memref<8xf32, #tpu.memory_space<smem>>
      memref.store %cst_42, %arg6[%c3_43] : memref<8xf32, #tpu.memory_space<smem>>
      %cst_44 = arith.constant 0.000000e+00 : f32
      %c4_45 = arith.constant 4 : index
      %106 = memref.load %arg6[%c4_45] : memref<8xf32, #tpu.memory_space<smem>>
      memref.store %cst_44, %arg6[%c4_45] : memref<8xf32, #tpu.memory_space<smem>>
    } else {
    }
    %c0_i32_2 = arith.constant 0 : i32
    %5 = arith.cmpi eq, %arg1, %c0_i32_2 : i32
    %6 = arith.extui %5 : i1 to i32
    %c0_i32_3 = arith.constant 0 : i32
    %7 = arith.cmpi ne, %6, %c0_i32_3 : i32
    scf.if %7 {
      %cst_36 = arith.constant 0.000000e+00 : f32
      %102 = vector.broadcast %cst_36 : f32 to vector<2x768xf32>
      %c0_37 = arith.constant 0 : index
      %c0_38 = arith.constant 0 : index
      %103 = vector.load %arg7[%c0_37, %c0_38] : memref<2x768xf32, #tpu.memory_space<vmem>>, vector<2x768xf32>
      tpu.vector_store %arg7[%c0_37, %c0_38], %102 {strides = array<i32>} : memref<2x768xf32, #tpu.memory_space<vmem>>, vector<2x768xf32>,
    } else {
    }
    %c0 = arith.constant 0 : index
    %c0_4 = arith.constant 0 : index
    %c0_5 = arith.constant 0 : index
    %8 = vector.load %arg2[%c0, %c0_4, %c0_5] : memref<1x16x256xf32, #tpu.memory_space<vmem>>, vector<1x16x256xf32>
    %9 = vector.shape_cast %8 : vector<1x16x256xf32> to vector<16x256xf32>
    %c0_6 = arith.constant 0 : index
    %c0_7 = arith.constant 0 : index
    %c0_8 = arith.constant 0 : index
    %10 = vector.load %arg3[%c0_6, %c0_7, %c0_8] : memref<1x16x256xf32, #tpu.memory_space<vmem>>, vector<1x16x256xf32>
    %11 = vector.shape_cast %10 : vector<1x16x256xf32> to vector<16x256xf32>
    %c0_9 = arith.constant 0 : index
    %c0_10 = arith.constant 0 : index
    %12 = vector.load %arg4[%c0_9, %c0_10] : memref<512x768xf32, #tpu.memory_space<vmem>>, vector<256x768xf32>
    %c256 = arith.constant 256 : index
    %c0_11 = arith.constant 0 : index
    %13 = vector.load %arg4[%c256, %c0_11] : memref<512x768xf32, #tpu.memory_space<vmem>>, vector<256x768xf32>
    %cst = arith.constant dense<0.000000e+00> : vector<16x768xf32>
    %14 = tpu.matmul %9, %12, %cst {dimension_numbers = #tpu.dot_dimension_numbers<[1], [0], [0], [1], [0, 0, 1, 1], [], []>} : vector<16x256xf32>, vector<256x768xf32>, vector<16x768xf32> -> vector<16x768xf32>
    %cst_12 = arith.constant dense<0.000000e+00> : vector<16x768xf32>
    %15 = tpu.matmul %9, %13, %cst_12 {dimension_numbers = #tpu.dot_dimension_numbers<[1], [0], [0], [1], [0, 0, 1, 1], [], []>} : vector<16x256xf32>, vector<256x768xf32>, vector<16x768xf32> -> vector<16x768xf32>
    %cst_13 = arith.constant dense<0.000000e+00> : vector<16x768xf32>
    %16 = tpu.matmul %11, %12, %cst_13 {dimension_numbers = #tpu.dot_dimension_numbers<[1], [0], [0], [1], [0, 0, 1, 1], [], []>} : vector<16x256xf32>, vector<256x768xf32>, vector<16x768xf32> -> vector<16x768xf32>
    %cst_14 = arith.constant dense<0.000000e+00> : vector<16x768xf32>
    %17 = tpu.matmul %11, %13, %cst_14 {dimension_numbers = #tpu.dot_dimension_numbers<[1], [0], [0], [1], [0, 0, 1, 1], [], []>} : vector<16x256xf32>, vector<256x768xf32>, vector<16x768xf32> -> vector<16x768xf32>
    %c0_15 = arith.constant 0 : index
    %c0_16 = arith.constant 0 : index
    %18 = vector.load %arg7[%c0_15, %c0_16] : memref<2x768xf32, #tpu.memory_space<vmem>>, vector<2x768xf32>
    %19 = vector.extract_strided_slice %18 {offsets = [0, 0], sizes = [1, 768], strides = [1, 1]} : vector<2x768xf32> to vector<1x768xf32>
    %20 = vector.extract_strided_slice %14 {offsets = [0, 0], sizes = [15, 768], strides = [1, 1]} : vector<16x768xf32> to vector<15x768xf32>
    %21 = tpu.concatenate %19, %20 in 0 : vector<1x768xf32>, vector<15x768xf32> -> vector<16x768xf32>
    %22 = arith.addf %21, %15 : vector<16x768xf32>
    %23 = vector.extract_strided_slice %18 {offsets = [1, 0], sizes = [1, 768], strides = [1, 1]} : vector<2x768xf32> to vector<1x768xf32>
    %24 = vector.extract_strided_slice %16 {offsets = [0, 0], sizes = [15, 768], strides = [1, 1]} : vector<16x768xf32> to vector<15x768xf32>
    %25 = tpu.concatenate %23, %24 in 0 : vector<1x768xf32>, vector<15x768xf32> -> vector<16x768xf32>
    %26 = arith.addf %25, %17 : vector<16x768xf32>
    %27 = vector.extract_strided_slice %14 {offsets = [15, 0], sizes = [1, 768], strides = [1, 1]} : vector<16x768xf32> to vector<1x768xf32>
    %28 = vector.extract_strided_slice %16 {offsets = [15, 0], sizes = [1, 768], strides = [1, 1]} : vector<16x768xf32> to vector<1x768xf32>
    %29 = tpu.concatenate %27, %28 in 0 : vector<1x768xf32>, vector<1x768xf32> -> vector<2x768xf32>
    %c0_17 = arith.constant 0 : index
    %c0_18 = arith.constant 0 : index
    %30 = vector.load %arg7[%c0_17, %c0_18] : memref<2x768xf32, #tpu.memory_space<vmem>>, vector<2x768xf32>
    tpu.vector_store %arg7[%c0_17, %c0_18], %29 {strides = array<i32>} : memref<2x768xf32, #tpu.memory_space<vmem>>, vector<2x768xf32>,
    %31 = vector.extract_strided_slice %22 {offsets = [0, 0], sizes = [16, 384], strides = [1, 1]} : vector<16x768xf32> to vector<16x384xf32>
    %32 = vector.extract_strided_slice %22 {offsets = [0, 384], sizes = [16, 384], strides = [1, 1]} : vector<16x768xf32> to vector<16x384xf32>
    %33 = vector.extract_strided_slice %26 {offsets = [0, 0], sizes = [16, 384], strides = [1, 1]} : vector<16x768xf32> to vector<16x384xf32>
    %34 = vector.extract_strided_slice %26 {offsets = [0, 384], sizes = [16, 384], strides = [1, 1]} : vector<16x768xf32> to vector<16x384xf32>
    %35 = arith.mulf %31, %31 : vector<16x384xf32>
    %36 = arith.mulf %32, %32 : vector<16x384xf32>
    %37 = arith.addf %35, %36 : vector<16x384xf32>
    %38 = arith.mulf %33, %33 : vector<16x384xf32>
    %39 = arith.mulf %34, %34 : vector<16x384xf32>
    %40 = arith.addf %38, %39 : vector<16x384xf32>
    %41 = tpu.iota {dimensions = array<i32: 0>} : vector<16x1xi32>
    %c16_i32 = arith.constant 16 : i32
    %42 = arith.muli %arg1, %c16_i32 : i32
    %c1_i32 = arith.constant 1 : i32
    %43 = arith.subi %42, %c1_i32 : i32
    %44 = vector.broadcast %43 : i32 to vector<16x1xi32>
    %45 = arith.addi %41, %44 : vector<16x1xi32>
    %c0_i32_19 = arith.constant 0 : i32
    %46 = vector.broadcast %c0_i32_19 : i32 to vector<16x1xi32>
    %47 = arith.cmpi sge, %45, %46 : vector<16x1xi32>
    %c9_i32 = arith.constant 9 : i32
    %48 = vector.broadcast %c9_i32 : i32 to vector<16x1xi32>
    %49 = arith.cmpi slt, %45, %48 : vector<16x1xi32>
    %50 = arith.andi %47, %49 : vector<16x1xi1>
    %cst_20 = arith.constant 0.000000e+00 : f32
    %51 = vector.shape_cast %50 : vector<16x1xi1> to vector<16x1xi1>
    %52 = vector.broadcast %51 : vector<16x1xi1> to vector<16x384xi1>
    %53 = vector.broadcast %cst_20 : f32 to vector<16x384xf32>
    %54 = arith.select %52, %37, %53 : vector<16x384xi1>, vector<16x384xf32>
    %cst_21 = arith.constant 0.000000e+00 : f32
    %55 = vector.shape_cast %50 : vector<16x1xi1> to vector<16x1xi1>
    %56 = vector.broadcast %55 : vector<16x1xi1> to vector<16x384xi1>
    %57 = vector.broadcast %cst_21 : f32 to vector<16x384xf32>
    %58 = arith.select %56, %40, %57 : vector<16x384xi1>, vector<16x384xf32>
    %c0_22 = arith.constant 0 : index
    %59 = memref.load %arg6[%c0_22] : memref<8xf32, #tpu.memory_space<smem>>
    %60 = vector.shape_cast %54 : vector<16x384xf32> to vector<1x16x384xf32>
    %cst_23 = arith.constant dense<0.000000e+00> : vector<1xf32>
    %61 = vector.multi_reduction <add>, %60, %cst_23 [1, 2] : vector<1x16x384xf32> to vector<1xf32>
    %62 = vector.shape_cast %61 : vector<1xf32> to vector<1x1x1xf32>
    %63 = vector.extract %62[0, 0, 0] : f32 from vector<1x1x1xf32>
    %64 = arith.addf %59, %63 : f32
    %c0_24 = arith.constant 0 : index
    %65 = memref.load %arg6[%c0_24] : memref<8xf32, #tpu.memory_space<smem>>
    memref.store %64, %arg6[%c0_24] : memref<8xf32, #tpu.memory_space<smem>>
    %c1 = arith.constant 1 : index
    %66 = memref.load %arg6[%c1] : memref<8xf32, #tpu.memory_space<smem>>
    %67 = vector.shape_cast %58 : vector<16x384xf32> to vector<1x16x384xf32>
    %cst_25 = arith.constant dense<0.000000e+00> : vector<1xf32>
    %68 = vector.multi_reduction <add>, %67, %cst_25 [1, 2] : vector<1x16x384xf32> to vector<1xf32>
    %69 = vector.shape_cast %68 : vector<1xf32> to vector<1x1x1xf32>
    %70 = vector.extract %69[0, 0, 0] : f32 from vector<1x1x1xf32>
    %71 = arith.addf %66, %70 : f32
    %c1_26 = arith.constant 1 : index
    %72 = memref.load %arg6[%c1_26] : memref<8xf32, #tpu.memory_space<smem>>
    memref.store %71, %arg6[%c1_26] : memref<8xf32, #tpu.memory_space<smem>>
    %c2 = arith.constant 2 : index
    %73 = memref.load %arg6[%c2] : memref<8xf32, #tpu.memory_space<smem>>
    %74 = arith.mulf %54, %54 : vector<16x384xf32>
    %75 = vector.shape_cast %74 : vector<16x384xf32> to vector<1x16x384xf32>
    %cst_27 = arith.constant dense<0.000000e+00> : vector<1xf32>
    %76 = vector.multi_reduction <add>, %75, %cst_27 [1, 2] : vector<1x16x384xf32> to vector<1xf32>
    %77 = vector.shape_cast %76 : vector<1xf32> to vector<1x1x1xf32>
    %78 = vector.extract %77[0, 0, 0] : f32 from vector<1x1x1xf32>
    %79 = arith.addf %73, %78 : f32
    %c2_28 = arith.constant 2 : index
    %80 = memref.load %arg6[%c2_28] : memref<8xf32, #tpu.memory_space<smem>>
    memref.store %79, %arg6[%c2_28] : memref<8xf32, #tpu.memory_space<smem>>
    %c3 = arith.constant 3 : index
    %81 = memref.load %arg6[%c3] : memref<8xf32, #tpu.memory_space<smem>>
    %82 = arith.mulf %58, %58 : vector<16x384xf32>
    %83 = vector.shape_cast %82 : vector<16x384xf32> to vector<1x16x384xf32>
    %cst_29 = arith.constant dense<0.000000e+00> : vector<1xf32>
    %84 = vector.multi_reduction <add>, %83, %cst_29 [1, 2] : vector<1x16x384xf32> to vector<1xf32>
    %85 = vector.shape_cast %84 : vector<1xf32> to vector<1x1x1xf32>
    %86 = vector.extract %85[0, 0, 0] : f32 from vector<1x1x1xf32>
    %87 = arith.addf %81, %86 : f32
    %c3_30 = arith.constant 3 : index
    %88 = memref.load %arg6[%c3_30] : memref<8xf32, #tpu.memory_space<smem>>
    memref.store %87, %arg6[%c3_30] : memref<8xf32, #tpu.memory_space<smem>>
    %c4 = arith.constant 4 : index
    %89 = memref.load %arg6[%c4] : memref<8xf32, #tpu.memory_space<smem>>
    %90 = arith.mulf %54, %58 : vector<16x384xf32>
    %91 = vector.shape_cast %90 : vector<16x384xf32> to vector<1x16x384xf32>
    %cst_31 = arith.constant dense<0.000000e+00> : vector<1xf32>
    %92 = vector.multi_reduction <add>, %91, %cst_31 [1, 2] : vector<1x16x384xf32> to vector<1xf32>
    %93 = vector.shape_cast %92 : vector<1xf32> to vector<1x1x1xf32>
    %94 = vector.extract %93[0, 0, 0] : f32 from vector<1x1x1xf32>
    %95 = arith.addf %89, %94 : f32
    %c4_32 = arith.constant 4 : index
    %96 = memref.load %arg6[%c4_32] : memref<8xf32, #tpu.memory_space<smem>>
    memref.store %95, %arg6[%c4_32] : memref<8xf32, #tpu.memory_space<smem>>
    %c1_i32_33 = arith.constant 1 : i32
    %97 = arith.cmpi eq, %arg0, %c1_i32_33 : i32
    %c0_i32_34 = arith.constant 0 : i32
    %98 = arith.cmpi eq, %arg1, %c0_i32_34 : i32
    %99 = arith.andi %97, %98 : i1
    %100 = arith.extui %99 : i1 to i32
    %c0_i32_35 = arith.constant 0 : i32
    %101 = arith.cmpi ne, %100, %c0_i32_35 : i32
    scf.if %101 {
      %c0_36 = arith.constant 0 : index
      %102 = memref.load %arg6[%c0_36] : memref<8xf32, #tpu.memory_space<smem>>
      %c1_37 = arith.constant 1 : index
      %103 = memref.load %arg6[%c1_37] : memref<8xf32, #tpu.memory_space<smem>>
      %c2_38 = arith.constant 2 : index
      %104 = memref.load %arg6[%c2_38] : memref<8xf32, #tpu.memory_space<smem>>
      %c3_39 = arith.constant 3 : index
      %105 = memref.load %arg6[%c3_39] : memref<8xf32, #tpu.memory_space<smem>>
      %c4_40 = arith.constant 4 : index
      %106 = memref.load %arg6[%c4_40] : memref<8xf32, #tpu.memory_space<smem>>
      %cst_41 = arith.constant 4.626000e+03 : f32
      %107 = arith.divf %102, %cst_41 : f32
      %cst_42 = arith.constant 4.626000e+03 : f32
      %108 = arith.divf %103, %cst_42 : f32
      %cst_43 = arith.constant 4.626000e+03 : f32
      %109 = arith.mulf %cst_43, %107 : f32
      %110 = arith.mulf %109, %107 : f32
      %111 = arith.subf %104, %110 : f32
      %cst_44 = arith.constant 4.626000e+03 : f32
      %112 = arith.mulf %cst_44, %108 : f32
      %113 = arith.mulf %112, %108 : f32
      %114 = arith.subf %105, %113 : f32
      %cst_45 = arith.constant 4.626000e+03 : f32
      %115 = arith.mulf %cst_45, %107 : f32
      %116 = arith.mulf %115, %108 : f32
      %117 = arith.subf %106, %116 : f32
      %cst_46 = arith.constant 4.626000e+03 : f32
      %cst_47 = arith.constant 1.000000e+00 : f32
      %118 = arith.subf %cst_46, %cst_47 : f32
      %119 = arith.divf %111, %118 : f32
      %120 = math.sqrt %119 : f32
      %cst_48 = arith.constant 9.99999997E-7 : f32
      %121 = arith.addf %120, %cst_48 : f32
      %cst_49 = arith.constant 4.626000e+03 : f32
      %cst_50 = arith.constant 1.000000e+00 : f32
      %122 = arith.subf %cst_49, %cst_50 : f32
      %123 = arith.divf %114, %122 : f32
      %124 = math.sqrt %123 : f32
      %cst_51 = arith.constant 9.99999997E-7 : f32
      %125 = arith.addf %124, %cst_51 : f32
      %126 = arith.mulf %121, %121 : f32
      %127 = arith.divf %111, %126 : f32
      %cst_52 = arith.constant 2.000000e+00 : f32
      %128 = arith.mulf %cst_52, %117 : f32
      %129 = arith.mulf %121, %125 : f32
      %130 = arith.divf %128, %129 : f32
      %131 = arith.subf %127, %130 : f32
      %132 = arith.mulf %125, %125 : f32
      %133 = arith.divf %114, %132 : f32
      %134 = arith.addf %131, %133 : f32
      %cst_53 = arith.constant 4.626000e+03 : f32
      %135 = arith.divf %134, %cst_53 : f32
      %c0_54 = arith.constant 0 : index
      %c0_55 = arith.constant 0 : index
      %136 = memref.load %arg5[%c0_54, %c0_55] : memref<1x1xf32, #tpu.memory_space<smem>>
      memref.store %135, %arg5[%c0_54, %c0_55] : memref<1x1xf32, #tpu.memory_space<smem>>
    } else {
    }
    return
  }
  func.func @transform_0(%arg0: i32, %arg1: i32) -> (i32, i32, i32) {
    %c0_i32 = arith.constant 0 : i32
    %c0_i32_0 = arith.constant 0 : i32
    return %arg0, %arg1, %c0_i32 : i32, i32, i32
  }
  func.func @transform_1(%arg0: i32, %arg1: i32) -> (i32, i32, i32) {
    %c0_i32 = arith.constant 0 : i32
    %c0_i32_0 = arith.constant 0 : i32
    return %arg0, %arg1, %c0_i32 : i32, i32, i32
  }
  func.func @transform_2(%arg0: i32, %arg1: i32) -> (i32, i32) {
    %c0_i32 = arith.constant 0 : i32
    %c0_i32_0 = arith.constant 0 : i32
    %c0_i32_1 = arith.constant 0 : i32
    return %c0_i32, %c0_i32_0 : i32, i32
  }
  func.func @transform_3(%arg0: i32, %arg1: i32) -> (i32, i32) {
    %c0_i32 = arith.constant 0 : i32
    %c0_i32_0 = arith.constant 0 : i32
    %c0_i32_1 = arith.constant 0 : i32
    return %c0_i32, %c0_i32_0 : i32, i32
  }
}

</mosaic_0001>

<llo_original>
// kernel: spectrogram_loss.1
$region0: #{spectrogram_loss.1}
  #allocation0 [shape = 'u32[]', space=smem, size = 0x4, offset = 0x4, fixed_abs, tag = 'smem constant byte address 0x4 - core index']
  #allocation1 [shape = 'u32[144,128]{1,0:T(1,128)}', space=vmem, size = 0x12000, scoped, tag = 'internal scratch']
  #allocation2 [shape = 'f32[8]{0:T(128)}', space=smem, size = 0x200, scoped, tag = 'scratch operand']
  #allocation3 [shape = 'f32[2,768]{1,0:T(2,128)}', space=vmem, size = 0x1800, scoped, tag = 'scratch operand']
  %s0 = inlined_call_operand.vmem [shape: f32[2,16,256], index: 0, kind: input, shape index: {}]
  %s1 = inlined_call_operand.vmem [shape: f32[2,16,256], index: 1, kind: input, shape index: {}]
  %s2 = inlined_call_operand.hbm [shape: f32[512,768], index: 2, kind: input, shape index: {}]
  %s3 = inlined_call_operand.hbm [shape: f32[1,1], index: 3, kind: output, shape index: {}]
  %s4 = sld [smem:[#allocation0]]
  $region61: #{spectrogram_loss.1} parent=0
    _
  %s6 = ssub.s32 1, %s4
  %s7 = scalar_select 0, %s6, %s4
  $region1: #{spectrogram_loss.1} parent=0
    #allocation4 [shape = 'u8[1572864]{0}', space=vmem, size = 0x180000, scoped, tag = 'input window, operand 2, single buffered']
    #allocation5 [shape = 's32[2]{0}', space=sflag, size = 0x8, scoped, tag = 'scoped memory for spectrogram_loss.1']
    #allocation6 [shape = 's32[2]{0}', space=sflag, size = 0x8, scoped, tag = 'scoped memory for spectrogram_loss.1']
    #allocation7 [shape = 'u8[512]{0}', space=smem, size = 0x200, scoped, tag = 'output window, operand 0, single buffered']
    %8 = vsyncpa [#allocation5], 0
    %9 = vsyncpa [#allocation6], 0
    loop: start=0, step=1, limit=4
    $region2: #{spectrogram_loss.1} parent=1 // loop_pre_header
      _
    $region3: #{spectrogram_loss.1} parent=1 // loop_header
      %s11 = sphi 0, %s15
      %p12 = scmp.ge.s32.totalorder %s11, 4
      %s18 = sphi 0, %s30
      %s19 = sphi 0, %s26
      %s20 = sphi 0, %s18
      %s21 = sphi 0, %s19
      %s22 = sphi 0, %s20
      %s23 = sphi 0, %s21
      %s35 = sphi 0, %s37
      %s38 = sphi 0, %s35
      %s39 = sphi 0, %s38
      %s55 = sphi 0, %s39
      %s63 = sphi 0, %s65
      %s66 = sphi 0, %s63
      %s67 = sphi 0, %s66
      %s83 = sphi 0, %s67
      %s87 = sphi 0, %s87
      %s89 = sphi 0, %s87
      %s90 = sphi 0, %s89
      %s104 = sphi 0, %s90
      %s108 = sphi 0, %s108
      %s110 = sphi 0, %s108
      %s111 = sphi 0, %s110
      %s125 = sphi 0, %s111
    $region4: #{spectrogram_loss.1} parent=1 // loop_header_branch
      %14 = sbr.rel (%p12) target = $region8
    $region5: #{spectrogram_loss.1} parent=1 // loop_body
      %s16 = ssub.s32 %s11, 1
      %s17 = ssub.s32 %s11, 2
      %s24 = sadd.s32 1, %s19
      %p25 = scmp.ge.s32.totalorder %s24, 1
      %s26 = scalar_select %p25, 0, %s24
      %s27 = sadd.s32 1, %s18
      %s28 = scalar_select %p25, %s27, %s18
      %p29 = scmp.ge.s32.totalorder %s28, 2
      %s30 = scalar_select %p29, 0, %s28
      %s31 = ssub.s32 %s18, %s30
      %s32 = ssub.s32 %s19, %s26
      %s33 = sor.u32 %s31, %s32
      %p34 = scmp.eq.s32.totalorder %s33, 0
      %s36 = sadd.s32 %s35, 1
      %s37 = scalar_select %p34, %s35, %s36
      %p40 = pneg %p34
      %p41 = scmp.eq.s32.totalorder %s11, 1
      %p42 = por %p40, %p41
      %p43 = scmp.ne.s32.totalorder %s35, %s38
      %p44 = scmp.eq.s32.totalorder %s11, 0
      %p45 = por %p43, %p44
      %p46 = scmp.ne.s32.totalorder %s35, %s38
      %p47 = scmp.eq.s32.totalorder %s16, 1
      %p48 = por %p46, %p47
      %p49 = scmp.ne.s32.totalorder %s38, %s39
      %p50 = scmp.eq.s32.totalorder %s16, 0
      %p51 = por %p49, %p50
      %p52 = scmp.ne.s32.totalorder %s38, %s39
      %p53 = scmp.eq.s32.totalorder %s17, 1
      %p54 = por %p52, %p53
      %p56 = scmp.ne.s32.totalorder %s39, %s55
      %p57 = scmp.eq.s32.totalorder %s17, 0
      %p58 = por %p56, %p57
      %s59 = ssub.s32 %s18, %s30
      %s60 = ssub.s32 %s19, %s26
      %s61 = sor.u32 %s59, %s60
      %p62 = scmp.eq.s32.totalorder %s61, 0
      %s64 = sadd.s32 %s63, 1
      %s65 = scalar_select %p62, %s63, %s64
      %p68 = pneg %p62
      %p69 = scmp.eq.s32.totalorder %s11, 1
      %p70 = por %p68, %p69
      %p71 = scmp.ne.s32.totalorder %s63, %s66
      %p72 = scmp.eq.s32.totalorder %s11, 0
      %p73 = por %p71, %p72
      %p74 = scmp.ne.s32.totalorder %s63, %s66
      %p75 = scmp.eq.s32.totalorder %s16, 1
      %p76 = por %p74, %p75
      %p77 = scmp.ne.s32.totalorder %s66, %s67
      %p78 = scmp.eq.s32.totalorder %s16, 0
      %p79 = por %p77, %p78
      %p80 = scmp.ne.s32.totalorder %s66, %s67
      %p81 = scmp.eq.s32.totalorder %s17, 1
      %p82 = por %p80, %p81
      %p84 = scmp.ne.s32.totalorder %s67, %s83
      %p85 = scmp.eq.s32.totalorder %s17, 0
      %p86 = por %p84, %p85
      %s88 = sadd.s32 %s87, 1
      %p91 = scmp.eq.s32.totalorder %s11, 1
      %p92 = scmp.ne.s32.totalorder %s87, %s89
      %p93 = scmp.eq.s32.totalorder %s11, 0
      %p94 = por %p92, %p93
      %p95 = scmp.ne.s32.totalorder %s87, %s89
      %p96 = scmp.eq.s32.totalorder %s16, 1
      %p97 = por %p95, %p96
      %p98 = scmp.ne.s32.totalorder %s89, %s90
      %p99 = scmp.eq.s32.totalorder %s16, 0
      %p100 = por %p98, %p99
      %p101 = scmp.ne.s32.totalorder %s89, %s90
      %p102 = scmp.eq.s32.totalorder %s17, 1
      %p103 = por %p101, %p102
      %p105 = scmp.ne.s32.totalorder %s90, %s104
      %p106 = scmp.eq.s32.totalorder %s17, 0
      %p107 = por %p105, %p106
      %s109 = sadd.s32 %s108, 1
      %p112 = scmp.eq.s32.totalorder %s11, 1
      %p113 = scmp.ne.s32.totalorder %s108, %s110
      %p114 = scmp.eq.s32.totalorder %s11, 0
      %p115 = por %p113, %p114
      %p116 = scmp.ne.s32.totalorder %s108, %s110
      %p117 = scmp.eq.s32.totalorder %s16, 1
      %p118 = por %p116, %p117
      %p119 = scmp.ne.s32.totalorder %s110, %s111
      %p120 = scmp.eq.s32.totalorder %s16, 0
      %p121 = por %p119, %p120
      %p122 = scmp.ne.s32.totalorder %s110, %s111
      %p123 = scmp.eq.s32.totalorder %s17, 1
      %p124 = por %p122, %p123
      %p126 = scmp.ne.s32.totalorder %s111, %s125
      %p127 = scmp.eq.s32.totalorder %s17, 0
      %p128 = por %p126, %p127
      %p129 = scmp.le.s32.totalorder 1, %s11
      %p130 = scmp.lt.s32.totalorder %s11, 3
      %p131 = pnand %p129, %p130
      %p132 = pneg %p131
      // Predicated region
      $region9: #{spectrogram_loss.1} parent=5 // pred_check
        _
      $region10: #{spectrogram_loss.1} parent=5 // pred_check_branch
        %134 = sbr.rel (%p131) target = $region12
      $region11: #{spectrogram_loss.1} parent=5 // pred_region
        %s135 = ssub.s32 %s11, 1
        // Predicated region
        $region13: #{spectrogram_loss.1} parent=11 // pred_check
          %p136 = pneg %p100
        $region14: #{spectrogram_loss.1} parent=11 // pred_check_branch
          %138 = sbr.rel (%p136) target = $region16
        $region15: #{spectrogram_loss.1} parent=11 // pred_region
          %s140 = ssub.s32 49152, 49152
          %141 = vsyncadd [#allocation5], %s140
          %s142 = sshll.u32 [#allocation4], 4
          %s143 = int_to_ptr.vmem [resolvable:$true] %s142
          %148 = dma.hbm_to_vmem [thread:$0]  %s2, 49152, %s143, [#allocation5], 768, 768, 48
        $region16: #{spectrogram_loss.1} parent=11 // pred_fallthru
          _
      $region12: #{spectrogram_loss.1} parent=5 // pred_fallthru
        _
      %p149 = scmp.lt.s32.totalorder %s11, 2
      // Predicated region
      $region17: #{spectrogram_loss.1} parent=5 // pred_check
        %p150 = pneg %p149
      $region18: #{spectrogram_loss.1} parent=5 // pred_check_branch
        %152 = sbr.rel (%p150) target = $region20
      $region19: #{spectrogram_loss.1} parent=5 // pred_region
        // Predicated region
        $region21: #{spectrogram_loss.1} parent=19 // pred_check
          %p153 = pneg %p45
        $region22: #{spectrogram_loss.1} parent=19 // pred_check_branch
          %155 = sbr.rel (%p153) target = $region24
        $region23: #{spectrogram_loss.1} parent=19 // pred_region
          %s156 = smul.u32 2, %s19
          %p157 = scmp.lt.s32.totalorder %s18, 1
          %s158 = scalar_select %p157, %s18, 1
          %p159 = scmp.lt.s32.totalorder %s156, 1
          %s160 = scalar_select %p159, %s156, 1
          %s161 = smul.addr %s160, 2
          %s162 = smul.addr %s158, 4
          %s163 = sadd.s32 %s161, %s162
          %s164 = smul.addr %s163, 8
          %s165 = scalar_lea.vmem %s0, %s164
          %s166 = smul.u32 2, %s19
        $region24: #{spectrogram_loss.1} parent=19 // pred_fallthru
          _
        // Predicated region
        $region25: #{spectrogram_loss.1} parent=19 // pred_check
          %p167 = pneg %p73
        $region26: #{spectrogram_loss.1} parent=19 // pred_check_branch
          %169 = sbr.rel (%p167) target = $region28
        $region27: #{spectrogram_loss.1} parent=19 // pred_region
          %s170 = smul.u32 2, %s19
          %p171 = scmp.lt.s32.totalorder %s18, 1
          %s172 = scalar_select %p171, %s18, 1
          %p173 = scmp.lt.s32.totalorder %s170, 1
          %s174 = scalar_select %p173, %s170, 1
          %s175 = smul.addr %s174, 2
          %s176 = smul.addr %s172, 4
          %s177 = sadd.s32 %s175, %s176
          %s178 = smul.addr %s177, 8
          %s179 = scalar_lea.vmem %s1, %s178
          %s180 = smul.u32 2, %s19
        $region28: #{spectrogram_loss.1} parent=19 // pred_fallthru
          _
      $region20: #{spectrogram_loss.1} parent=5 // pred_fallthru
        _
      %p181 = scmp.le.s32.totalorder 1, %s11
      %p182 = scmp.lt.s32.totalorder %s11, 3
      %p183 = pnand %p181, %p182
      %p184 = pneg %p183
      // Predicated region
      $region29: #{spectrogram_loss.1} parent=5 // pred_check
        _
      $region30: #{spectrogram_loss.1} parent=5 // pred_check_branch
        %186 = sbr.rel (%p183) target = $region32
      $region31: #{spectrogram_loss.1} parent=5 // pred_region
        %s187 = ssub.s32 %s11, 1
        // Predicated region
        $region33: #{spectrogram_loss.1} parent=31 // pred_check
          %p188 = pneg %p100
        $region34: #{spectrogram_loss.1} parent=31 // pred_check_branch
          %190 = sbr.rel (%p188) target = $region36
        $region35: #{spectrogram_loss.1} parent=31 // pred_region
          %191 = dma.done [#allocation5], 49152
        $region36: #{spectrogram_loss.1} parent=31 // pred_fallthru
          _
        %s192 = smul.u32 2, %s21
        %p193 = scmp.lt.s32.totalorder %s20, 1
        %s194 = scalar_select %p193, %s20, 1
        %p195 = scmp.lt.s32.totalorder %s192, 1
        %s196 = scalar_select %p195, %s192, 1
        %s197 = smul.addr %s196, 2
        %s198 = smul.addr %s194, 4
        %s199 = sadd.s32 %s197, %s198
        %s200 = smul.addr %s199, 8
        %s201 = scalar_lea.vmem %s0, %s200
        %p202 = pneg %p51
        %p203 = pneg %p48
        %s204 = smul.u32 2, %s21
        %p205 = scmp.lt.s32.totalorder %s20, 1
        %s206 = scalar_select %p205, %s20, 1
        %p207 = scmp.lt.s32.totalorder %s204, 1
        %s208 = scalar_select %p207, %s204, 1
        %s209 = smul.addr %s208, 2
        %s210 = smul.addr %s206, 4
        %s211 = sadd.s32 %s209, %s210
        %s212 = smul.addr %s211, 8
        %s213 = scalar_lea.vmem %s1, %s212
        %p214 = pneg %p79
        %p215 = pneg %p76
        %p216 = pneg %p100
        %p217 = pneg %p97
        %p218 = pneg %p121
        %p219 = pneg %p118
        %s220 = smul.u32 2, %s21
        %p221 = scmp.lt.s32.totalorder %s20, 1
        %s222 = scalar_select %p221, %s20, 1
        %p223 = scmp.lt.s32.totalorder %s220, 1
        %s224 = scalar_select %p223, %s220, 1
        %s225 = smul.addr %s224, 2
        %s226 = smul.addr %s222, 4
        %s227 = sadd.s32 %s225, %s226
        %s228 = smul.addr %s227, 8
        %s229 = scalar_lea.vmem %s0, %s228
        %s230 = smul.u32 2, %s21
        %s231 = smul.u32 2, %s21
        %p232 = scmp.lt.s32.totalorder %s20, 1
        %s233 = scalar_select %p232, %s20, 1
        %p234 = scmp.lt.s32.totalorder %s231, 1
        %s235 = scalar_select %p234, %s231, 1
        %s236 = smul.addr %s235, 2
        %s237 = smul.addr %s233, 4
        %s238 = sadd.s32 %s236, %s237
        %s239 = smul.addr %s238, 8
        %s240 = scalar_lea.vmem %s1, %s239
        %s241 = smul.u32 2, %s21
        %p242 = scmp.eq.s32.totalorder %s20, 0
        %p243 = scmp.eq.s32.totalorder %s21, 0
        %p244 = pnand %p242, %p243
        %p245 = pneg %p244
        // Predicated region
        $region37: #{spectrogram_loss.1} parent=31 // pred_check
          _
        $region38: #{spectrogram_loss.1} parent=31 // pred_check_branch
          %247 = sbr.rel (%p244) target = $region40
        $region39: #{spectrogram_loss.1} parent=31 // pred_region
          %s248 = scalar_lea.smem [#allocation2], 0
          %249 = sst [smem:[%s248]] 0.0
          %s250 = scalar_lea.smem [#allocation2], 1
          %251 = sst [smem:[%s250]] 0.0
          %s252 = scalar_lea.smem [#allocation2], 2
          %253 = sst [smem:[%s252]] 0.0
          %s254 = scalar_lea.smem [#allocation2], 3
          %255 = sst [smem:[%s254]] 0.0
          %s256 = scalar_lea.smem [#allocation2], 4
          %257 = sst [smem:[%s256]] 0.0
        $region40: #{spectrogram_loss.1} parent=31 // pred_fallthru
          _
        // Predicated region
        $region41: #{spectrogram_loss.1} parent=31 // pred_check
          %p258 = pneg %p243
        $region42: #{spectrogram_loss.1} parent=31 // pred_check_branch
          %260 = sbr.rel (%p258) target = $region44
        $region43: #{spectrogram_loss.1} parent=31 // pred_region
          %261 = vst [vmem:[#allocation3] sm:$0xff] 0.0
          %262 = vst [vmem:[#allocation3 + $0x8] sm:$0xf] 0.0
        $region44: #{spectrogram_loss.1} parent=31 // pred_fallthru
          _
        %v263 = vld [vmem:[%s229] sm:$0xff]
        %v264 = vld [vmem:[%s229 + $0x8] sm:$0xff]
        %v265 = vld [vmem:[%s229 + $0x10] sm:$0xff]
        %v266 = vld [vmem:[%s229 + $0x18] sm:$0xff]
        %v267 = vld [vmem:[%s240] sm:$0xff]
        %v268 = vld [vmem:[%s240 + $0x8] sm:$0xff]
        %v269 = vld [vmem:[%s240 + $0x10] sm:$0xff]
        %v270 = vld [vmem:[%s240 + $0x18] sm:$0xff]
        %v271 = vld [vmem:[#allocation4] sm:$0xff]
        %v272 = vld [vmem:[#allocation4 + $0x8] sm:$0xff]
        %v273 = vld [vmem:[#allocation4 + $0x10] sm:$0xff]
        %v274 = vld [vmem:[#allocation4 + $0x18] sm:$0xff]
        %v275 = vld [vmem:[#allocation4 + $0x20] sm:$0xff]
        %v276 = vld [vmem:[#allocation4 + $0x28] sm:$0xff]
        %v277 = vld [vmem:[#allocation4 + $0x30] sm:$0xff]
        %v278 = vld [vmem:[#allocation4 + $0x38] sm:$0xff]
        %v279 = vld [vmem:[#allocation4 + $0x40] sm:$0xff]
        %v280 = vld [vmem:[#allocation4 + $0x48] sm:$0xff]
        %v281 = vld [vmem:[#allocation4 + $0x50] sm:$0xff]
        %v282 = vld [vmem:[#allocation4 + $0x58] sm:$0xff]
        %v283 = vld [vmem:[#allocation4 + $0x60] sm:$0xff]
        %v284 = vld [vmem:[#allocation4 + $0x68] sm:$0xff]
        %v285 = vld [vmem:[#allocation4 + $0x70] sm:$0xff]
        %v286 = vld [vmem:[#allocation4 + $0x78] sm:$0xff]
        %v287 = vld [vmem:[#allocation4 + $0x80] sm:$0xff]
        %v288 = vld [vmem:[#allocation4 + $0x88] sm:$0xff]
        %v289 = vld [vmem:[#allocation4 + $0x90] sm:$0xff]
        %v290 = vld [vmem:[#allocation4 + $0x98] sm:$0xff]
        %v291 = vld [vmem:[#allocation4 + $0xa0] sm:$0xff]
        %v292 = vld [vmem:[#allocation4 + $0xa8] sm:$0xff]
        %v293 = vld [vmem:[#allocation4 + $0xb0] sm:$0xff]
        %v294 = vld [vmem:[#allocation4 + $0xb8] sm:$0xff]
        %v295 = vld [vmem:[#allocation4 + $0xc0] sm:$0xff]
        %v296 = vld [vmem:[#allocation4 + $0xc8] sm:$0xff]
        %v297 = vld [vmem:[#allocation4 + $0xd0] sm:$0xff]
        %v298 = vld [vmem:[#allocation4 + $0xd8] sm:$0xff]
        %v299 = vld [vmem:[#allocation4 + $0xe0] sm:$0xff]
        %v300 = vld [vmem:[#allocation4 + $0xe8] sm:$0xff]
        %v301 = vld [vmem:[#allocation4 + $0xf0] sm:$0xff]
        %v302 = vld [vmem:[#allocation4 + $0xf8] sm:$0xff]
        %v303 = vld [vmem:[#allocation4 + $0x100] sm:$0xff]
        %v304 = vld [vmem:[#allocation4 + $0x108] sm:$0xff]
        %v305 = vld [vmem:[#allocation4 + $0x110] sm:$0xff]
        %v306 = vld [vmem:[#allocation4 + $0x118] sm:$0xff]
        %v307 = vld [vmem:[#allocation4 + $0x120] sm:$0xff]
        %v308 = vld [vmem:[#allocation4 + $0x128] sm:$0xff]
        %v309 = vld [vmem:[#allocation4 + $0x130] sm:$0xff]
        %v310 = vld [vmem:[#allocation4 + $0x138] sm:$0xff]
        %v311 = vld [vmem:[#allocation4 + $0x140] sm:$0xff]
        %v312 = vld [vmem:[#allocation4 + $0x148] sm:$0xff]
        %v313 = vld [vmem:[#allocation4 + $0x150] sm:$0xff]
        %v314 = vld [vmem:[#allocation4 + $0x158] sm:$0xff]
        %v315 = vld [vmem:[#allocation4 + $0x160] sm:$0xff]
        %v316 = vld [vmem:[#allocation4 + $0x168] sm:$0xff]
        %v317 = vld [vmem:[#allocation4 + $0x170] sm:$0xff]
        %v318 = vld [vmem:[#allocation4 + $0x178] sm:$0xff]
        %v319 = vld [vmem:[#allocation4 + $0x180] sm:$0xff]
        %v320 = vld [vmem:[#allocation4 + $0x188] sm:$0xff]
        %v321 = vld [vmem:[#allocation4 + $0x190] sm:$0xff]
        %v322 = vld [vmem:[#allocation4 + $0x198] sm:$0xff]
        %v323 = vld [vmem:[#allocation4 + $0x1a0] sm:$0xff]
        %v324 = vld [vmem:[#allocation4 + $0x1a8] sm:$0xff]
        %v325 = vld [vmem:[#allocation4 + $0x1b0] sm:$0xff]
        %v326 = vld [vmem:[#allocation4 + $0x1b8] sm:$0xff]
        %v327 = vld [vmem:[#allocation4 + $0x1c0] sm:$0xff]
        %v328 = vld [vmem:[#allocation4 + $0x1c8] sm:$0xff]
        %v329 = vld [vmem:[#allocation4 + $0x1d0] sm:$0xff]
        %v330 = vld [vmem:[#allocation4 + $0x1d8] sm:$0xff]
        %v331 = vld [vmem:[#allocation4 + $0x1e0] sm:$0xff]
        %v332 = vld [vmem:[#allocation4 + $0x1e8] sm:$0xff]
        %v333 = vld [vmem:[#allocation4 + $0x1f0] sm:$0xff]
        %v334 = vld [vmem:[#allocation4 + $0x1f8] sm:$0xff]
        %v335 = vld [vmem:[#allocation4 + $0x200] sm:$0xff]
        %v336 = vld [vmem:[#allocation4 + $0x208] sm:$0xff]
        %v337 = vld [vmem:[#allocation4 + $0x210] sm:$0xff]
        %v338 = vld [vmem:[#allocation4 + $0x218] sm:$0xff]
        %v339 = vld [vmem:[#allocation4 + $0x220] sm:$0xff]
        %v340 = vld [vmem:[#allocation4 + $0x228] sm:$0xff]
        %v341 = vld [vmem:[#allocation4 + $0x230] sm:$0xff]
        %v342 = vld [vmem:[#allocation4 + $0x238] sm:$0xff]
        %v343 = vld [vmem:[#allocation4 + $0x240] sm:$0xff]
        %v344 = vld [vmem:[#allocation4 + $0x248] sm:$0xff]
        %v345 = vld [vmem:[#allocation4 + $0x250] sm:$0xff]
        %v346 = vld [vmem:[#allocation4 + $0x258] sm:$0xff]
        %v347 = vld [vmem:[#allocation4 + $0x260] sm:$0xff]
        %v348 = vld [vmem:[#allocation4 + $0x268] sm:$0xff]
        %v349 = vld [vmem:[#allocation4 + $0x270] sm:$0xff]
        %v350 = vld [vmem:[#allocation4 + $0x278] sm:$0xff]
        %v351 = vld [vmem:[#allocation4 + $0x280] sm:$0xff]
        %v352 = vld [vmem:[#allocation4 + $0x288] sm:$0xff]
        %v353 = vld [vmem:[#allocation4 + $0x290] sm:$0xff]
        %v354 = vld [vmem:[#allocation4 + $0x298] sm:$0xff]
        %v355 = vld [vmem:[#allocation4 + $0x2a0] sm:$0xff]
        %v356 = vld [vmem:[#allocation4 + $0x2a8] sm:$0xff]
        %v357 = vld [vmem:[#allocation4 + $0x2b0] sm:$0xff]
        %v358 = vld [vmem:[#allocation4 + $0x2b8] sm:$0xff]
        %v359 = vld [vmem:[#allocation4 + $0x2c0] sm:$0xff]
        %v360 = vld [vmem:[#allocation4 + $0x2c8] sm:$0xff]
        %v361 = vld [vmem:[#allocation4 + $0x2d0] sm:$0xff]
        %v362 = vld [vmem:[#allocation4 + $0x2d8] sm:$0xff]
        %v363 = vld [vmem:[#allocation4 + $0x2e0] sm:$0xff]
        %v364 = vld [vmem:[#allocation4 + $0x2e8] sm:$0xff]
        %v365 = vld [vmem:[#allocation4 + $0x2f0] sm:$0xff]
        %v366 = vld [vmem:[#allocation4 + $0x2f8] sm:$0xff]
        %v367 = vld [vmem:[#allocation4 + $0x300] sm:$0xff]
        %v368 = vld [vmem:[#allocation4 + $0x308] sm:$0xff]
        %v369 = vld [vmem:[#allocation4 + $0x310] sm:$0xff]
        %v370 = vld [vmem:[#allocation4 + $0x318] sm:$0xff]
        %v371 = vld [vmem:[#allocation4 + $0x320] sm:$0xff]
        %v372 = vld [vmem:[#allocation4 + $0x328] sm:$0xff]
        %v373 = vld [vmem:[#allocation4 + $0x330] sm:$0xff]
        %v374 = vld [vmem:[#allocation4 + $0x338] sm:$0xff]
        %v375 = vld [vmem:[#allocation4 + $0x340] sm:$0xff]
        %v376 = vld [vmem:[#allocation4 + $0x348] sm:$0xff]
        %v377 = vld [vmem:[#allocation4 + $0x350] sm:$0xff]
        %v378 = vld [vmem:[#allocation4 + $0x358] sm:$0xff]
        %v379 = vld [vmem:[#allocation4 + $0x360] sm:$0xff]
        %v380 = vld [vmem:[#allocation4 + $0x368] sm:$0xff]
        %v381 = vld [vmem:[#allocation4 + $0x370] sm:$0xff]
        %v382 = vld [vmem:[#allocation4 + $0x378] sm:$0xff]
        %v383 = vld [vmem:[#allocation4 + $0x380] sm:$0xff]
        %v384 = vld [vmem:[#allocation4 + $0x388] sm:$0xff]
        %v385 = vld [vmem:[#allocation4 + $0x390] sm:$0xff]
        %v386 = vld [vmem:[#allocation4 + $0x398] sm:$0xff]
        %v387 = vld [vmem:[#allocation4 + $0x3a0] sm:$0xff]
        %v388 = vld [vmem:[#allocation4 + $0x3a8] sm:$0xff]
        %v389 = vld [vmem:[#allocation4 + $0x3b0] sm:$0xff]
        %v390 = vld [vmem:[#allocation4 + $0x3b8] sm:$0xff]
        %v391 = vld [vmem:[#allocation4 + $0x3c0] sm:$0xff]
        %v392 = vld [vmem:[#allocation4 + $0x3c8] sm:$0xff]
        %v393 = vld [vmem:[#allocation4 + $0x3d0] sm:$0xff]
        %v394 = vld [vmem:[#allocation4 + $0x3d8] sm:$0xff]
        %v395 = vld [vmem:[#allocation4 + $0x3e0] sm:$0xff]
        %v396 = vld [vmem:[#allocation4 + $0x3e8] sm:$0xff]
        %v397 = vld [vmem:[#allocation4 + $0x3f0] sm:$0xff]
        %v398 = vld [vmem:[#allocation4 + $0x3f8] sm:$0xff]
        %v399 = vld [vmem:[#allocation4 + $0x400] sm:$0xff]
        %v400 = vld [vmem:[#allocation4 + $0x408] sm:$0xff]
        %v401 = vld [vmem:[#allocation4 + $0x410] sm:$0xff]
        %v402 = vld [vmem:[#allocation4 + $0x418] sm:$0xff]
        %v403 = vld [vmem:[#allocation4 + $0x420] sm:$0xff]
        %v404 = vld [vmem:[#allocation4 + $0x428] sm:$0xff]
        %v405 = vld [vmem:[#allocation4 + $0x430] sm:$0xff]
        %v406 = vld [vmem:[#allocation4 + $0x438] sm:$0xff]
        %v407 = vld [vmem:[#allocation4 + $0x440] sm:$0xff]
        %v408 = vld [vmem:[#allocation4 + $0x448] sm:$0xff]
        %v409 = vld [vmem:[#allocation4 + $0x450] sm:$0xff]
        %v410 = vld [vmem:[#allocation4 + $0x458] sm:$0xff]
        %v411 = vld [vmem:[#allocation4 + $0x460] sm:$0xff]
        %v412 = vld [vmem:[#allocation4 + $0x468] sm:$0xff]
        %v413 = vld [vmem:[#allocation4 + $0x470] sm:$0xff]
        %v414 = vld [vmem:[#allocation4 + $0x478] sm:$0xff]
        %v415 = vld [vmem:[#allocation4 + $0x480] sm:$0xff]
        %v416 = vld [vmem:[#allocation4 + $0x488] sm:$0xff]
        %v417 = vld [vmem:[#allocation4 + $0x490] sm:$0xff]
        %v418 = vld [vmem:[#allocation4 + $0x498] sm:$0xff]
        %v419 = vld [vmem:[#allocation4 + $0x4a0] sm:$0xff]
        %v420 = vld [vmem:[#allocation4 + $0x4a8] sm:$0xff]
        %v421 = vld [vmem:[#allocation4 + $0x4b0] sm:$0xff]
        %v422 = vld [vmem:[#allocation4 + $0x4b8] sm:$0xff]
        %v423 = vld [vmem:[#allocation4 + $0x4c0] sm:$0xff]
        %v424 = vld [vmem:[#allocation4 + $0x4c8] sm:$0xff]
        %v425 = vld [vmem:[#allocation4 + $0x4d0] sm:$0xff]
        %v426 = vld [vmem:[#allocation4 + $0x4d8] sm:$0xff]
        %v427 = vld [vmem:[#allocation4 + $0x4e0] sm:$0xff]
        %v428 = vld [vmem:[#allocation4 + $0x4e8] sm:$0xff]
        %v429 = vld [vmem:[#allocation4 + $0x4f0] sm:$0xff]
        %v430 = vld [vmem:[#allocation4 + $0x4f8] sm:$0xff]
        %v431 = vld [vmem:[#allocation4 + $0x500] sm:$0xff]
        %v432 = vld [vmem:[#allocation4 + $0x508] sm:$0xff]
        %v433 = vld [vmem:[#allocation4 + $0x510] sm:$0xff]
        %v434 = vld [vmem:[#allocation4 + $0x518] sm:$0xff]
        %v435 = vld [vmem:[#allocation4 + $0x520] sm:$0xff]
        %v436 = vld [vmem:[#allocation4 + $0x528] sm:$0xff]
        %v437 = vld [vmem:[#allocation4 + $0x530] sm:$0xff]
        %v438 = vld [vmem:[#allocation4 + $0x538] sm:$0xff]
        %v439 = vld [vmem:[#allocation4 + $0x540] sm:$0xff]
        %v440 = vld [vmem:[#allocation4 + $0x548] sm:$0xff]
        %v441 = vld [vmem:[#allocation4 + $0x550] sm:$0xff]
        %v442 = vld [vmem:[#allocation4 + $0x558] sm:$0xff]
        %v443 = vld [vmem:[#allocation4 + $0x560] sm:$0xff]
        %v444 = vld [vmem:[#allocation4 + $0x568] sm:$0xff]
        %v445 = vld [vmem:[#allocation4 + $0x570] sm:$0xff]
        %v446 = vld [vmem:[#allocation4 + $0x578] sm:$0xff]
        %v447 = vld [vmem:[#allocation4 + $0x580] sm:$0xff]
        %v448 = vld [vmem:[#allocation4 + $0x588] sm:$0xff]
        %v449 = vld [vmem:[#allocation4 + $0x590] sm:$0xff]
        %v450 = vld [vmem:[#allocation4 + $0x598] sm:$0xff]
        %v451 = vld [vmem:[#allocation4 + $0x5a0] sm:$0xff]
        %v452 = vld [vmem:[#allocation4 + $0x5a8] sm:$0xff]
        %v453 = vld [vmem:[#allocation4 + $0x5b0] sm:$0xff]
        %v454 = vld [vmem:[#allocation4 + $0x5b8] sm:$0xff]
        %v455 = vld [vmem:[#allocation4 + $0x5c0] sm:$0xff]
        %v456 = vld [vmem:[#allocation4 + $0x5c8] sm:$0xff]
        %v457 = vld [vmem:[#allocation4 + $0x5d0] sm:$0xff]
        %v458 = vld [vmem:[#allocation4 + $0x5d8] sm:$0xff]
        %v459 = vld [vmem:[#allocation4 + $0x5e0] sm:$0xff]
        %v460 = vld [vmem:[#allocation4 + $0x5e8] sm:$0xff]
        %v461 = vld [vmem:[#allocation4 + $0x5f0] sm:$0xff]
        %v462 = vld [vmem:[#allocation4 + $0x5f8] sm:$0xff]
        %v463 = vld [vmem:[#allocation4 + $0x600] sm:$0xff]
        %v464 = vld [vmem:[#allocation4 + $0x608] sm:$0xff]
        %v465 = vld [vmem:[#allocation4 + $0x610] sm:$0xff]
        %v466 = vld [vmem:[#allocation4 + $0x618] sm:$0xff]
        %v467 = vld [vmem:[#allocation4 + $0x620] sm:$0xff]
        %v468 = vld [vmem:[#allocation4 + $0x628] sm:$0xff]
        %v469 = vld [vmem:[#allocation4 + $0x630] sm:$0xff]
        %v470 = vld [vmem:[#allocation4 + $0x638] sm:$0xff]
        %v471 = vld [vmem:[#allocation4 + $0x640] sm:$0xff]
        %v472 = vld [vmem:[#allocation4 + $0x648] sm:$0xff]
        %v473 = vld [vmem:[#allocation4 + $0x650] sm:$0xff]
        %v474 = vld [vmem:[#allocation4 + $0x658] sm:$0xff]
        %v475 = vld [vmem:[#allocation4 + $0x660] sm:$0xff]
        %v476 = vld [vmem:[#allocation4 + $0x668] sm:$0xff]
        %v477 = vld [vmem:[#allocation4 + $0x670] sm:$0xff]
        %v478 = vld [vmem:[#allocation4 + $0x678] sm:$0xff]
        %v479 = vld [vmem:[#allocation4 + $0x680] sm:$0xff]
        %v480 = vld [vmem:[#allocation4 + $0x688] sm:$0xff]
        %v481 = vld [vmem:[#allocation4 + $0x690] sm:$0xff]
        %v482 = vld [vmem:[#allocation4 + $0x698] sm:$0xff]
        %v483 = vld [vmem:[#allocation4 + $0x6a0] sm:$0xff]
        %v484 = vld [vmem:[#allocation4 + $0x6a8] sm:$0xff]
        %v485 = vld [vmem:[#allocation4 + $0x6b0] sm:$0xff]
        %v486 = vld [vmem:[#allocation4 + $0x6b8] sm:$0xff]
        %v487 = vld [vmem:[#allocation4 + $0x6c0] sm:$0xff]
        %v488 = vld [vmem:[#allocation4 + $0x6c8] sm:$0xff]
        %v489 = vld [vmem:[#allocation4 + $0x6d0] sm:$0xff]
        %v490 = vld [vmem:[#allocation4 + $0x6d8] sm:$0xff]
        %v491 = vld [vmem:[#allocation4 + $0x6e0] sm:$0xff]
        %v492 = vld [vmem:[#allocation4 + $0x6e8] sm:$0xff]
        %v493 = vld [vmem:[#allocation4 + $0x6f0] sm:$0xff]
        %v494 = vld [vmem:[#allocation4 + $0x6f8] sm:$0xff]
        %v495 = vld [vmem:[#allocation4 + $0x700] sm:$0xff]
        %v496 = vld [vmem:[#allocation4 + $0x708] sm:$0xff]
        %v497 = vld [vmem:[#allocation4 + $0x710] sm:$0xff]
        %v498 = vld [vmem:[#allocation4 + $0x718] sm:$0xff]
        %v499 = vld [vmem:[#allocation4 + $0x720] sm:$0xff]
        %v500 = vld [vmem:[#allocation4 + $0x728] sm:$0xff]
        %v501 = vld [vmem:[#allocation4 + $0x730] sm:$0xff]
        %v502 = vld [vmem:[#allocation4 + $0x738] sm:$0xff]
        %v503 = vld [vmem:[#allocation4 + $0x740] sm:$0xff]
        %v504 = vld [vmem:[#allocation4 + $0x748] sm:$0xff]
        %v505 = vld [vmem:[#allocation4 + $0x750] sm:$0xff]
        %v506 = vld [vmem:[#allocation4 + $0x758] sm:$0xff]
        %v507 = vld [vmem:[#allocation4 + $0x760] sm:$0xff]
        %v508 = vld [vmem:[#allocation4 + $0x768] sm:$0xff]
        %v509 = vld [vmem:[#allocation4 + $0x770] sm:$0xff]
        %v510 = vld [vmem:[#allocation4 + $0x778] sm:$0xff]
        %v511 = vld [vmem:[#allocation4 + $0x780] sm:$0xff]
        %v512 = vld [vmem:[#allocation4 + $0x788] sm:$0xff]
        %v513 = vld [vmem:[#allocation4 + $0x790] sm:$0xff]
        %v514 = vld [vmem:[#allocation4 + $0x798] sm:$0xff]
        %v515 = vld [vmem:[#allocation4 + $0x7a0] sm:$0xff]
        %v516 = vld [vmem:[#allocation4 + $0x7a8] sm:$0xff]
        %v517 = vld [vmem:[#allocation4 + $0x7b0] sm:$0xff]
        %v518 = vld [vmem:[#allocation4 + $0x7b8] sm:$0xff]
        %v519 = vld [vmem:[#allocation4 + $0x7c0] sm:$0xff]
        %v520 = vld [vmem:[#allocation4 + $0x7c8] sm:$0xff]
        %v521 = vld [vmem:[#allocation4 + $0x7d0] sm:$0xff]
        %v522 = vld [vmem:[#allocation4 + $0x7d8] sm:$0xff]
        %v523 = vld [vmem:[#allocation4 + $0x7e0] sm:$0xff]
        %v524 = vld [vmem:[#allocation4 + $0x7e8] sm:$0xff]
        %v525 = vld [vmem:[#allocation4 + $0x7f0] sm:$0xff]
        %v526 = vld [vmem:[#allocation4 + $0x7f8] sm:$0xff]
        %v527 = vld [vmem:[#allocation4 + $0x800] sm:$0xff]
        %v528 = vld [vmem:[#allocation4 + $0x808] sm:$0xff]
        %v529 = vld [vmem:[#allocation4 + $0x810] sm:$0xff]
        %v530 = vld [vmem:[#allocation4 + $0x818] sm:$0xff]
        %v531 = vld [vmem:[#allocation4 + $0x820] sm:$0xff]
        %v532 = vld [vmem:[#allocation4 + $0x828] sm:$0xff]
        %v533 = vld [vmem:[#allocation4 + $0x830] sm:$0xff]
        %v534 = vld [vmem:[#allocation4 + $0x838] sm:$0xff]
        %v535 = vld [vmem:[#allocation4 + $0x840] sm:$0xff]
        %v536 = vld [vmem:[#allocation4 + $0x848] sm:$0xff]
        %v537 = vld [vmem:[#allocation4 + $0x850] sm:$0xff]
        %v538 = vld [vmem:[#allocation4 + $0x858] sm:$0xff]
        %v539 = vld [vmem:[#allocation4 + $0x860] sm:$0xff]
        %v540 = vld [vmem:[#allocation4 + $0x868] sm:$0xff]
        %v541 = vld [vmem:[#allocation4 + $0x870] sm:$0xff]
        %v542 = vld [vmem:[#allocation4 + $0x878] sm:$0xff]
        %v543 = vld [vmem:[#allocation4 + $0x880] sm:$0xff]
        %v544 = vld [vmem:[#allocation4 + $0x888] sm:$0xff]
        %v545 = vld [vmem:[#allocation4 + $0x890] sm:$0xff]
        %v546 = vld [vmem:[#allocation4 + $0x898] sm:$0xff]
        %v547 = vld [vmem:[#allocation4 + $0x8a0] sm:$0xff]
        %v548 = vld [vmem:[#allocation4 + $0x8a8] sm:$0xff]
        %v549 = vld [vmem:[#allocation4 + $0x8b0] sm:$0xff]
        %v550 = vld [vmem:[#allocation4 + $0x8b8] sm:$0xff]
        %v551 = vld [vmem:[#allocation4 + $0x8c0] sm:$0xff]
        %v552 = vld [vmem:[#allocation4 + $0x8c8] sm:$0xff]
        %v553 = vld [vmem:[#allocation4 + $0x8d0] sm:$0xff]
        %v554 = vld [vmem:[#allocation4 + $0x8d8] sm:$0xff]
        %v555 = vld [vmem:[#allocation4 + $0x8e0] sm:$0xff]
        %v556 = vld [vmem:[#allocation4 + $0x8e8] sm:$0xff]
        %v557 = vld [vmem:[#allocation4 + $0x8f0] sm:$0xff]
        %v558 = vld [vmem:[#allocation4 + $0x8f8] sm:$0xff]
        %v559 = vld [vmem:[#allocation4 + $0x900] sm:$0xff]
        %v560 = vld [vmem:[#allocation4 + $0x908] sm:$0xff]
        %v561 = vld [vmem:[#allocation4 + $0x910] sm:$0xff]
        %v562 = vld [vmem:[#allocation4 + $0x918] sm:$0xff]
        %v563 = vld [vmem:[#allocation4 + $0x920] sm:$0xff]
        %v564 = vld [vmem:[#allocation4 + $0x928] sm:$0xff]
        %v565 = vld [vmem:[#allocation4 + $0x930] sm:$0xff]
        %v566 = vld [vmem:[#allocation4 + $0x938] sm:$0xff]
        %v567 = vld [vmem:[#allocation4 + $0x940] sm:$0xff]
        %v568 = vld [vmem:[#allocation4 + $0x948] sm:$0xff]
        %v569 = vld [vmem:[#allocation4 + $0x950] sm:$0xff]
        %v570 = vld [vmem:[#allocation4 + $0x958] sm:$0xff]
        %v571 = vld [vmem:[#allocation4 + $0x960] sm:$0xff]
        %v572 = vld [vmem:[#allocation4 + $0x968] sm:$0xff]
        %v573 = vld [vmem:[#allocation4 + $0x970] sm:$0xff]
        %v574 = vld [vmem:[#allocation4 + $0x978] sm:$0xff]
        %v575 = vld [vmem:[#allocation4 + $0x980] sm:$0xff]
        %v576 = vld [vmem:[#allocation4 + $0x988] sm:$0xff]
        %v577 = vld [vmem:[#allocation4 + $0x990] sm:$0xff]
        %v578 = vld [vmem:[#allocation4 + $0x998] sm:$0xff]
        %v579 = vld [vmem:[#allocation4 + $0x9a0] sm:$0xff]
        %v580 = vld [vmem:[#allocation4 + $0x9a8] sm:$0xff]
        %v581 = vld [vmem:[#allocation4 + $0x9b0] sm:$0xff]
        %v582 = vld [vmem:[#allocation4 + $0x9b8] sm:$0xff]
        %v583 = vld [vmem:[#allocation4 + $0x9c0] sm:$0xff]
        %v584 = vld [vmem:[#allocation4 + $0x9c8] sm:$0xff]
        %v585 = vld [vmem:[#allocation4 + $0x9d0] sm:$0xff]
        %v586 = vld [vmem:[#allocation4 + $0x9d8] sm:$0xff]
        %v587 = vld [vmem:[#allocation4 + $0x9e0] sm:$0xff]
        %v588 = vld [vmem:[#allocation4 + $0x9e8] sm:$0xff]
        %v589 = vld [vmem:[#allocation4 + $0x9f0] sm:$0xff]
        %v590 = vld [vmem:[#allocation4 + $0x9f8] sm:$0xff]
        %v591 = vld [vmem:[#allocation4 + $0xa00] sm:$0xff]
        %v592 = vld [vmem:[#allocation4 + $0xa08] sm:$0xff]
        %v593 = vld [vmem:[#allocation4 + $0xa10] sm:$0xff]
        %v594 = vld [vmem:[#allocation4 + $0xa18] sm:$0xff]
        %v595 = vld [vmem:[#allocation4 + $0xa20] sm:$0xff]
        %v596 = vld [vmem:[#allocation4 + $0xa28] sm:$0xff]
        %v597 = vld [vmem:[#allocation4 + $0xa30] sm:$0xff]
        %v598 = vld [vmem:[#allocation4 + $0xa38] sm:$0xff]
        %v599 = vld [vmem:[#allocation4 + $0xa40] sm:$0xff]
        %v600 = vld [vmem:[#allocation4 + $0xa48] sm:$0xff]
        %v601 = vld [vmem:[#allocation4 + $0xa50] sm:$0xff]
        %v602 = vld [vmem:[#allocation4 + $0xa58] sm:$0xff]
        %v603 = vld [vmem:[#allocation4 + $0xa60] sm:$0xff]
        %v604 = vld [vmem:[#allocation4 + $0xa68] sm:$0xff]
        %v605 = vld [vmem:[#allocation4 + $0xa70] sm:$0xff]
        %v606 = vld [vmem:[#allocation4 + $0xa78] sm:$0xff]
        %v607 = vld [vmem:[#allocation4 + $0xa80] sm:$0xff]
        %v608 = vld [vmem:[#allocation4 + $0xa88] sm:$0xff]
        %v609 = vld [vmem:[#allocation4 + $0xa90] sm:$0xff]
        %v610 = vld [vmem:[#allocation4 + $0xa98] sm:$0xff]
        %v611 = vld [vmem:[#allocation4 + $0xaa0] sm:$0xff]
        %v612 = vld [vmem:[#allocation4 + $0xaa8] sm:$0xff]
        %v613 = vld [vmem:[#allocation4 + $0xab0] sm:$0xff]
        %v614 = vld [vmem:[#allocation4 + $0xab8] sm:$0xff]
        %v615 = vld [vmem:[#allocation4 + $0xac0] sm:$0xff]
        %v616 = vld [vmem:[#allocation4 + $0xac8] sm:$0xff]
        %v617 = vld [vmem:[#allocation4 + $0xad0] sm:$0xff]
        %v618 = vld [vmem:[#allocation4 + $0xad8] sm:$0xff]
        %v619 = vld [vmem:[#allocation4 + $0xae0] sm:$0xff]
        %v620 = vld [vmem:[#allocation4 + $0xae8] sm:$0xff]
        %v621 = vld [vmem:[#allocation4 + $0xaf0] sm:$0xff]
        %v622 = vld [vmem:[#allocation4 + $0xaf8] sm:$0xff]
        %v623 = vld [vmem:[#allocation4 + $0xb00] sm:$0xff]
        %v624 = vld [vmem:[#allocation4 + $0xb08] sm:$0xff]
        %v625 = vld [vmem:[#allocation4 + $0xb10] sm:$0xff]
        %v626 = vld [vmem:[#allocation4 + $0xb18] sm:$0xff]
        %v627 = vld [vmem:[#allocation4 + $0xb20] sm:$0xff]
        %v628 = vld [vmem:[#allocation4 + $0xb28] sm:$0xff]
        %v629 = vld [vmem:[#allocation4 + $0xb30] sm:$0xff]
        %v630 = vld [vmem:[#allocation4 + $0xb38] sm:$0xff]
        %v631 = vld [vmem:[#allocation4 + $0xb40] sm:$0xff]
        %v632 = vld [vmem:[#allocation4 + $0xb48] sm:$0xff]
        %v633 = vld [vmem:[#allocation4 + $0xb50] sm:$0xff]
        %v634 = vld [vmem:[#allocation4 + $0xb58] sm:$0xff]
        %v635 = vld [vmem:[#allocation4 + $0xb60] sm:$0xff]
        %v636 = vld [vmem:[#allocation4 + $0xb68] sm:$0xff]
        %v637 = vld [vmem:[#allocation4 + $0xb70] sm:$0xff]
        %v638 = vld [vmem:[#allocation4 + $0xb78] sm:$0xff]
        %v639 = vld [vmem:[#allocation4 + $0xb80] sm:$0xff]
        %v640 = vld [vmem:[#allocation4 + $0xb88] sm:$0xff]
        %v641 = vld [vmem:[#allocation4 + $0xb90] sm:$0xff]
        %v642 = vld [vmem:[#allocation4 + $0xb98] sm:$0xff]
        %v643 = vld [vmem:[#allocation4 + $0xba0] sm:$0xff]
        %v644 = vld [vmem:[#allocation4 + $0xba8] sm:$0xff]
        %v645 = vld [vmem:[#allocation4 + $0xbb0] sm:$0xff]
        %v646 = vld [vmem:[#allocation4 + $0xbb8] sm:$0xff]
        %v647 = vld [vmem:[#allocation4 + $0xbc0] sm:$0xff]
        %v648 = vld [vmem:[#allocation4 + $0xbc8] sm:$0xff]
        %v649 = vld [vmem:[#allocation4 + $0xbd0] sm:$0xff]
        %v650 = vld [vmem:[#allocation4 + $0xbd8] sm:$0xff]
        %v651 = vld [vmem:[#allocation4 + $0xbe0] sm:$0xff]
        %v652 = vld [vmem:[#allocation4 + $0xbe8] sm:$0xff]
        %v653 = vld [vmem:[#allocation4 + $0xbf0] sm:$0xff]
        %v654 = vld [vmem:[#allocation4 + $0xbf8] sm:$0xff]
        %655 = vmatprep.subr.mxu0 %v272
        %656 = vmatpush1.msra.mxu0 %v271
        %657 = vmatprep.subr.mxu0 %v278
        %658 = vmatpush1.msra.mxu0 %v277
        %659 = vmatprep.subr.mxu0 %v284
        %660 = vmatpush1.msra.mxu0 %v283
        %661 = vmatprep.subr.mxu0 %v290
        %662 = vmatpush1.msra.mxu0 %v289
        %663 = vmatprep.subr.mxu0 %v296
        %664 = vmatpush1.msra.mxu0 %v295
        %665 = vmatprep.subr.mxu0 %v302
        %666 = vmatpush1.msra.mxu0 %v301
        %667 = vmatprep.subr.mxu0 %v308
        %668 = vmatpush1.msra.mxu0 %v307
        %669 = vmatprep.subr.mxu0 %v314
        %670 = vmatpush1.msra.mxu0 %v313
        %671 = vmatprep.subr.mxu0 %v320
        %672 = vmatpush1.msra.mxu0 %v319
        %673 = vmatprep.subr.mxu0 %v326
        %674 = vmatpush1.msra.mxu0 %v325
        %675 = vmatprep.subr.mxu0 %v332
        %676 = vmatpush1.msra.mxu0 %v331
        %677 = vmatprep.subr.mxu0 %v338
        %678 = vmatpush1.msra.mxu0 %v337
        %679 = vmatprep.subr.mxu0 %v344
        %680 = vmatpush1.msra.mxu0 %v343
        %681 = vmatprep.subr.mxu0 %v350
        %682 = vmatpush1.msra.mxu0 %v349
        %683 = vmatprep.subr.mxu0 %v356
        %684 = vmatpush1.msra.mxu0 %v355
        %685 = vmatprep.subr.mxu0 %v362
        %686 = vmatpush1.msra.mxu0 %v361
        %687 = vmatprep.subr.mxu0 %v368
        %688 = vmatpush1.msra.mxu0 %v367
        %689 = vmatprep.subr.mxu0 %v374
        %690 = vmatpush1.msra.mxu0 %v373
        %691 = vmatprep.subr.mxu0 %v380
        %692 = vmatpush1.msra.mxu0 %v379
        %693 = vmatprep.subr.mxu0 %v386
        %694 = vmatpush1.msra.mxu0 %v385
        %695 = vmatprep.subr.mxu0 %v392
        %696 = vmatpush1.msra.mxu0 %v391
        %697 = vmatprep.subr.mxu0 %v398
        %698 = vmatpush1.msra.mxu0 %v397
        %699 = vmatprep.subr.mxu0 %v404
        %700 = vmatpush1.msra.mxu0 %v403
        %701 = vmatprep.subr.mxu0 %v410
        %702 = vmatpush1.msra.mxu0 %v409
        %703 = vmatprep.subr.mxu0 %v416
        %704 = vmatpush1.msra.mxu0 %v415
        %705 = vmatprep.subr.mxu0 %v422
        %706 = vmatpush1.msra.mxu0 %v421
        %707 = vmatprep.subr.mxu0 %v428
        %708 = vmatpush1.msra.mxu0 %v427
        %709 = vmatprep.subr.mxu0 %v434
        %710 = vmatpush1.msra.mxu0 %v433
        %711 = vmatprep.subr.mxu0 %v440
        %712 = vmatpush1.msra.mxu0 %v439
        %713 = vmatprep.subr.mxu0 %v446
        %714 = vmatpush1.msra.mxu0 %v445
        %715 = vmatprep.subr.mxu0 %v452
        %716 = vmatpush1.msra.mxu0 %v451
        %717 = vmatprep.subr.mxu0 %v458
        %718 = vmatpush1.msra.mxu0 %v457
        %719 = vmatprep.mubr.f32.mxu0 %v264
        %720 = vmatmul.mubr.f32.gmra.mrb[0].mxu0 %v263
        %v721 = vpop.f32.mrb[0].mxu0
        %v722 = vadd.f32 0.0, %v721
        %v723 = vpop.f32.mrb[0].mxu0
        %v724 = vadd.f32 0.0, %v723
        %725 = vmatprep.mubr.f32.mxu0 %v266
        %726 = vmatmul.mubr.f32.gmra.mrb[0].mxu0 %v265
        %v727 = vpop.f32.mrb[0].mxu0
        %v728 = vadd.f32 0.0, %v727
        %v729 = vpop.f32.mrb[0].mxu0
        %v730 = vadd.f32 0.0, %v729
        %731 = vdwg.mxu0
        %732 = vmatprep.subr.mxu0 %v274
        %733 = vmatpush1.msra.mxu0 %v273
        %734 = vmatprep.subr.mxu0 %v280
        %735 = vmatpush1.msra.mxu0 %v279
        %736 = vmatprep.subr.mxu0 %v286
        %737 = vmatpush1.msra.mxu0 %v285
        %738 = vmatprep.subr.mxu0 %v292
        %739 = vmatpush1.msra.mxu0 %v291
        %740 = vmatprep.subr.mxu0 %v298
        %741 = vmatpush1.msra.mxu0 %v297
        %742 = vmatprep.subr.mxu0 %v304
        %743 = vmatpush1.msra.mxu0 %v303
        %744 = vmatprep.subr.mxu0 %v310
        %745 = vmatpush1.msra.mxu0 %v309
        %746 = vmatprep.subr.mxu0 %v316
        %747 = vmatpush1.msra.mxu0 %v315
        %748 = vmatprep.subr.mxu0 %v322
        %749 = vmatpush1.msra.mxu0 %v321
        %750 = vmatprep.subr.mxu0 %v328
        %751 = vmatpush1.msra.mxu0 %v327
        %752 = vmatprep.subr.mxu0 %v334
        %753 = vmatpush1.msra.mxu0 %v333
        %754 = vmatprep.subr.mxu0 %v340
        %755 = vmatpush1.msra.mxu0 %v339
        %756 = vmatprep.subr.mxu0 %v346
        %757 = vmatpush1.msra.mxu0 %v345
        %758 = vmatprep.subr.mxu0 %v352
        %759 = vmatpush1.msra.mxu0 %v351
        %760 = vmatprep.subr.mxu0 %v358
        %761 = vmatpush1.msra.mxu0 %v357
        %762 = vmatprep.subr.mxu0 %v364
        %763 = vmatpush1.msra.mxu0 %v363
        %764 = vmatprep.subr.mxu0 %v370
        %765 = vmatpush1.msra.mxu0 %v369
        %766 = vmatprep.subr.mxu0 %v376
        %767 = vmatpush1.msra.mxu0 %v375
        %768 = vmatprep.subr.mxu0 %v382
        %769 = vmatpush1.msra.mxu0 %v381
        %770 = vmatprep.subr.mxu0 %v388
        %771 = vmatpush1.msra.mxu0 %v387
        %772 = vmatprep.subr.mxu0 %v394
        %773 = vmatpush1.msra.mxu0 %v393
        %774 = vmatprep.subr.mxu0 %v400
        %775 = vmatpush1.msra.mxu0 %v399
        %776 = vmatprep.subr.mxu0 %v406
        %777 = vmatpush1.msra.mxu0 %v405
        %778 = vmatprep.subr.mxu0 %v412
        %779 = vmatpush1.msra.mxu0 %v411
        %780 = vmatprep.subr.mxu0 %v418
        %781 = vmatpush1.msra.mxu0 %v417
        %782 = vmatprep.subr.mxu0 %v424
        %783 = vmatpush1.msra.mxu0 %v423
        %784 = vmatprep.subr.mxu0 %v430
        %785 = vmatpush1.msra.mxu0 %v429
        %786 = vmatprep.subr.mxu0 %v436
        %787 = vmatpush1.msra.mxu0 %v435
        %788 = vmatprep.subr.mxu0 %v442
        %789 = vmatpush1.msra.mxu0 %v441
        %790 = vmatprep.subr.mxu0 %v448
        %791 = vmatpush1.msra.mxu0 %v447
        %792 = vmatprep.subr.mxu0 %v454
        %793 = vmatpush1.msra.mxu0 %v453
        %794 = vmatprep.subr.mxu0 %v460
        %795 = vmatpush1.msra.mxu0 %v459
        %796 = vmatprep.mubr.f32.mxu0 %v264
        %797 = vmatmul.mubr.f32.gmra.mrb[0].mxu0 %v263
        %v798 = vpop.f32.mrb[0].mxu0
        %v799 = vadd.f32 0.0, %v798
        %v800 = vpop.f32.mrb[0].mxu0
        %v801 = vadd.f32 0.0, %v800
        %802 = vmatprep.mubr.f32.mxu0 %v266
        %803 = vmatmul.mubr.f32.gmra.mrb[0].mxu0 %v265
        %v804 = vpop.f32.mrb[0].mxu0
        %v805 = vadd.f32 0.0, %v804
        %v806 = vpop.f32.mrb[0].mxu0
        %v807 = vadd.f32 0.0, %v806
        %808 = vdwg.mxu0
        %809 = vmatprep.subr.mxu0 %v276
        %810 = vmatpush1.msra.mxu0 %v275
        %811 = vmatprep.subr.mxu0 %v282
        %812 = vmatpush1.msra.mxu0 %v281
        %813 = vmatprep.subr.mxu0 %v288
        %814 = vmatpush1.msra.mxu0 %v287
        %815 = vmatprep.subr.mxu0 %v294
        %816 = vmatpush1.msra.mxu0 %v293
        %817 = vmatprep.subr.mxu0 %v300
        %818 = vmatpush1.msra.mxu0 %v299
        %819 = vmatprep.subr.mxu0 %v306
        %820 = vmatpush1.msra.mxu0 %v305
        %821 = vmatprep.subr.mxu0 %v312
        %822 = vmatpush1.msra.mxu0 %v311
        %823 = vmatprep.subr.mxu0 %v318
        %824 = vmatpush1.msra.mxu0 %v317
        %825 = vmatprep.subr.mxu0 %v324
        %826 = vmatpush1.msra.mxu0 %v323
        %827 = vmatprep.subr.mxu0 %v330
        %828 = vmatpush1.msra.mxu0 %v329
        %829 = vmatprep.subr.mxu0 %v336
        %830 = vmatpush1.msra.mxu0 %v335
        %831 = vmatprep.subr.mxu0 %v342
        %832 = vmatpush1.msra.mxu0 %v341
        %833 = vmatprep.subr.mxu0 %v348
        %834 = vmatpush1.msra.mxu0 %v347
        %835 = vmatprep.subr.mxu0 %v354
        %836 = vmatpush1.msra.mxu0 %v353
        %837 = vmatprep.subr.mxu0 %v360
        %838 = vmatpush1.msra.mxu0 %v359
        %839 = vmatprep.subr.mxu0 %v366
        %840 = vmatpush1.msra.mxu0 %v365
        %841 = vmatprep.subr.mxu0 %v372
        %842 = vmatpush1.msra.mxu0 %v371
        %843 = vmatprep.subr.mxu0 %v378
        %844 = vmatpush1.msra.mxu0 %v377
        %845 = vmatprep.subr.mxu0 %v384
        %846 = vmatpush1.msra.mxu0 %v383
        %847 = vmatprep.subr.mxu0 %v390
        %848 = vmatpush1.msra.mxu0 %v389
        %849 = vmatprep.subr.mxu0 %v396
        %850 = vmatpush1.msra.mxu0 %v395
        %851 = vmatprep.subr.mxu0 %v402
        %852 = vmatpush1.msra.mxu0 %v401
        %853 = vmatprep.subr.mxu0 %v408
        %854 = vmatpush1.msra.mxu0 %v407
        %855 = vmatprep.subr.mxu0 %v414
        %856 = vmatpush1.msra.mxu0 %v413
        %857 = vmatprep.subr.mxu0 %v420
        %858 = vmatpush1.msra.mxu0 %v419
        %859 = vmatprep.subr.mxu0 %v426
        %860 = vmatpush1.msra.mxu0 %v425
        %861 = vmatprep.subr.mxu0 %v432
        %862 = vmatpush1.msra.mxu0 %v431
        %863 = vmatprep.subr.mxu0 %v438
        %864 = vmatpush1.msra.mxu0 %v437
        %865 = vmatprep.subr.mxu0 %v444
        %866 = vmatpush1.msra.mxu0 %v443
        %867 = vmatprep.subr.mxu0 %v450
        %868 = vmatpush1.msra.mxu0 %v449
        %869 = vmatprep.subr.mxu0 %v456
        %870 = vmatpush1.msra.mxu0 %v455
        %871 = vmatprep.subr.mxu0 %v462
        %872 = vmatpush1.msra.mxu0 %v461
        %873 = vmatprep.mubr.f32.mxu0 %v264
        %874 = vmatmul.mubr.f32.gmra.mrb[0].mxu0 %v263
        %v875 = vpop.f32.mrb[0].mxu0
        %v876 = vadd.f32 0.0, %v875
        %v877 = vpop.f32.mrb[0].mxu0
        %v878 = vadd.f32 0.0, %v877
        %879 = vmatprep.mubr.f32.mxu0 %v266
        %880 = vmatmul.mubr.f32.gmra.mrb[0].mxu0 %v265
        %v881 = vpop.f32.mrb[0].mxu0
        %v882 = vadd.f32 0.0, %v881
        %v883 = vpop.f32.mrb[0].mxu0
        %v884 = vadd.f32 0.0, %v883
        %885 = vdwg.mxu0
        %886 = vmatprep.subr.mxu0 %v464
        %887 = vmatpush1.msra.mxu0 %v463
        %888 = vmatprep.subr.mxu0 %v470
        %889 = vmatpush1.msra.mxu0 %v469
        %890 = vmatprep.subr.mxu0 %v476
        %891 = vmatpush1.msra.mxu0 %v475
        %892 = vmatprep.subr.mxu0 %v482
        %893 = vmatpush1.msra.mxu0 %v481
        %894 = vmatprep.subr.mxu0 %v488
        %895 = vmatpush1.msra.mxu0 %v487
        %896 = vmatprep.subr.mxu0 %v494
        %897 = vmatpush1.msra.mxu0 %v493
        %898 = vmatprep.subr.mxu0 %v500
        %899 = vmatpush1.msra.mxu0 %v499
        %900 = vmatprep.subr.mxu0 %v506
        %901 = vmatpush1.msra.mxu0 %v505
        %902 = vmatprep.subr.mxu0 %v512
        %903 = vmatpush1.msra.mxu0 %v511
        %904 = vmatprep.subr.mxu0 %v518
        %905 = vmatpush1.msra.mxu0 %v517
        %906 = vmatprep.subr.mxu0 %v524
        %907 = vmatpush1.msra.mxu0 %v523
        %908 = vmatprep.subr.mxu0 %v530
        %909 = vmatpush1.msra.mxu0 %v529
        %910 = vmatprep.subr.mxu0 %v536
        %911 = vmatpush1.msra.mxu0 %v535
        %912 = vmatprep.subr.mxu0 %v542
        %913 = vmatpush1.msra.mxu0 %v541
        %914 = vmatprep.subr.mxu0 %v548
        %915 = vmatpush1.msra.mxu0 %v547
        %916 = vmatprep.subr.mxu0 %v554
        %917 = vmatpush1.msra.mxu0 %v553
        %918 = vmatprep.subr.mxu0 %v560
        %919 = vmatpush1.msra.mxu0 %v559
        %920 = vmatprep.subr.mxu0 %v566
        %921 = vmatpush1.msra.mxu0 %v565
        %922 = vmatprep.subr.mxu0 %v572
        %923 = vmatpush1.msra.mxu0 %v571
        %924 = vmatprep.subr.mxu0 %v578
        %925 = vmatpush1.msra.mxu0 %v577
        %926 = vmatprep.subr.mxu0 %v584
        %927 = vmatpush1.msra.mxu0 %v583
        %928 = vmatprep.subr.mxu0 %v590
        %929 = vmatpush1.msra.mxu0 %v589
        %930 = vmatprep.subr.mxu0 %v596
        %931 = vmatpush1.msra.mxu0 %v595
        %932 = vmatprep.subr.mxu0 %v602
        %933 = vmatpush1.msra.mxu0 %v601
        %934 = vmatprep.subr.mxu0 %v608
        %935 = vmatpush1.msra.mxu0 %v607
        %936 = vmatprep.subr.mxu0 %v614
        %937 = vmatpush1.msra.mxu0 %v613
        %938 = vmatprep.subr.mxu0 %v620
        %939 = vmatpush1.msra.mxu0 %v619
        %940 = vmatprep.subr.mxu0 %v626
        %941 = vmatpush1.msra.mxu0 %v625
        %942 = vmatprep.subr.mxu0 %v632
        %943 = vmatpush1.msra.mxu0 %v631
        %944 = vmatprep.subr.mxu0 %v638
        %945 = vmatpush1.msra.mxu0 %v637
        %946 = vmatprep.subr.mxu0 %v644
        %947 = vmatpush1.msra.mxu0 %v643
        %948 = vmatprep.subr.mxu0 %v650
        %949 = vmatpush1.msra.mxu0 %v649
        %950 = vmatprep.mubr.f32.mxu0 %v264
        %951 = vmatmul.mubr.f32.gmra.mrb[0].mxu0 %v263
        %v952 = vpop.f32.mrb[0].mxu0
        %v953 = vadd.f32 0.0, %v952
        %v954 = vpop.f32.mrb[0].mxu0
        %v955 = vadd.f32 0.0, %v954
        %956 = vmatprep.mubr.f32.mxu0 %v266
        %957 = vmatmul.mubr.f32.gmra.mrb[0].mxu0 %v265
        %v958 = vpop.f32.mrb[0].mxu0
        %v959 = vadd.f32 0.0, %v958
        %v960 = vpop.f32.mrb[0].mxu0
        %v961 = vadd.f32 0.0, %v960
        %962 = vdwg.mxu0
        %963 = vmatprep.subr.mxu0 %v466
        %964 = vmatpush1.msra.mxu0 %v465
        %965 = vmatprep.subr.mxu0 %v472
        %966 = vmatpush1.msra.mxu0 %v471
        %967 = vmatprep.subr.mxu0 %v478
        %968 = vmatpush1.msra.mxu0 %v477
        %969 = vmatprep.subr.mxu0 %v484
        %970 = vmatpush1.msra.mxu0 %v483
        %971 = vmatprep.subr.mxu0 %v490
        %972 = vmatpush1.msra.mxu0 %v489
        %973 = vmatprep.subr.mxu0 %v496
        %974 = vmatpush1.msra.mxu0 %v495
        %975 = vmatprep.subr.mxu0 %v502
        %976 = vmatpush1.msra.mxu0 %v501
        %977 = vmatprep.subr.mxu0 %v508
        %978 = vmatpush1.msra.mxu0 %v507
        %979 = vmatprep.subr.mxu0 %v514
        %980 = vmatpush1.msra.mxu0 %v513
        %981 = vmatprep.subr.mxu0 %v520
        %982 = vmatpush1.msra.mxu0 %v519
        %983 = vmatprep.subr.mxu0 %v526
        %984 = vmatpush1.msra.mxu0 %v525
        %985 = vmatprep.subr.mxu0 %v532
        %986 = vmatpush1.msra.mxu0 %v531
        %987 = vmatprep.subr.mxu0 %v538
        %988 = vmatpush1.msra.mxu0 %v537
        %989 = vmatprep.subr.mxu0 %v544
        %990 = vmatpush1.msra.mxu0 %v543
        %991 = vmatprep.subr.mxu0 %v550
        %992 = vmatpush1.msra.mxu0 %v549
        %993 = vmatprep.subr.mxu0 %v556
        %994 = vmatpush1.msra.mxu0 %v555
        %995 = vmatprep.subr.mxu0 %v562
        %996 = vmatpush1.msra.mxu0 %v561
        %997 = vmatprep.subr.mxu0 %v568
        %998 = vmatpush1.msra.mxu0 %v567
        %999 = vmatprep.subr.mxu0 %v574
        %1000 = vmatpush1.msra.mxu0 %v573
        %1001 = vmatprep.subr.mxu0 %v580
        %1002 = vmatpush1.msra.mxu0 %v579
        %1003 = vmatprep.subr.mxu0 %v586
        %1004 = vmatpush1.msra.mxu0 %v585
        %1005 = vmatprep.subr.mxu0 %v592
        %1006 = vmatpush1.msra.mxu0 %v591
        %1007 = vmatprep.subr.mxu0 %v598
        %1008 = vmatpush1.msra.mxu0 %v597
        %1009 = vmatprep.subr.mxu0 %v604
        %1010 = vmatpush1.msra.mxu0 %v603
        %1011 = vmatprep.subr.mxu0 %v610
        %1012 = vmatpush1.msra.mxu0 %v609
        %1013 = vmatprep.subr.mxu0 %v616
        %1014 = vmatpush1.msra.mxu0 %v615
        %1015 = vmatprep.subr.mxu0 %v622
        %1016 = vmatpush1.msra.mxu0 %v621
        %1017 = vmatprep.subr.mxu0 %v628
        %1018 = vmatpush1.msra.mxu0 %v627
        %1019 = vmatprep.subr.mxu0 %v634
        %1020 = vmatpush1.msra.mxu0 %v633
        %1021 = vmatprep.subr.mxu0 %v640
        %1022 = vmatpush1.msra.mxu0 %v639
        %1023 = vmatprep.subr.mxu0 %v646
        %1024 = vmatpush1.msra.mxu0 %v645
        %1025 = vmatprep.subr.mxu0 %v652
        %1026 = vmatpush1.msra.mxu0 %v651
        %1027 = vmatprep.mubr.f32.mxu0 %v264
        %1028 = vmatmul.mubr.f32.gmra.mrb[0].mxu0 %v263
        %v1029 = vpop.f32.mrb[0].mxu0
        %v1030 = vadd.f32 0.0, %v1029
        %v1031 = vpop.f32.mrb[0].mxu0
        %v1032 = vadd.f32 0.0, %v1031
        %1033 = vmatprep.mubr.f32.mxu0 %v266
        %1034 = vmatmul.mubr.f32.gmra.mrb[0].mxu0 %v265
        %v1035 = vpop.f32.mrb[0].mxu0
        %v1036 = vadd.f32 0.0, %v1035
        %v1037 = vpop.f32.mrb[0].mxu0
        %v1038 = vadd.f32 0.0, %v1037
        %1039 = vdwg.mxu0
        %1040 = vmatprep.subr.mxu0 %v468
        %1041 = vmatpush1.msra.mxu0 %v467
        %1042 = vmatprep.subr.mxu0 %v474
        %1043 = vmatpush1.msra.mxu0 %v473
        %1044 = vmatprep.subr.mxu0 %v480
        %1045 = vmatpush1.msra.mxu0 %v479
        %1046 = vmatprep.subr.mxu0 %v486
        %1047 = vmatpush1.msra.mxu0 %v485
        %1048 = vmatprep.subr.mxu0 %v492
        %1049 = vmatpush1.msra.mxu0 %v491
        %1050 = vmatprep.subr.mxu0 %v498
        %1051 = vmatpush1.msra.mxu0 %v497
        %1052 = vmatprep.subr.mxu0 %v504
        %1053 = vmatpush1.msra.mxu0 %v503
        %1054 = vmatprep.subr.mxu0 %v510
        %1055 = vmatpush1.msra.mxu0 %v509
        %1056 = vmatprep.subr.mxu0 %v516
        %1057 = vmatpush1.msra.mxu0 %v515
        %1058 = vmatprep.subr.mxu0 %v522
        %1059 = vmatpush1.msra.mxu0 %v521
        %1060 = vmatprep.subr.mxu0 %v528
        %1061 = vmatpush1.msra.mxu0 %v527
        %1062 = vmatprep.subr.mxu0 %v534
        %1063 = vmatpush1.msra.mxu0 %v533
        %1064 = vmatprep.subr.mxu0 %v540
        %1065 = vmatpush1.msra.mxu0 %v539
        %1066 = vmatprep.subr.mxu0 %v546
        %1067 = vmatpush1.msra.mxu0 %v545
        %1068 = vmatprep.subr.mxu0 %v552
        %1069 = vmatpush1.msra.mxu0 %v551
        %1070 = vmatprep.subr.mxu0 %v558
        %1071 = vmatpush1.msra.mxu0 %v557
        %1072 = vmatprep.subr.mxu0 %v564
        %1073 = vmatpush1.msra.mxu0 %v563
        %1074 = vmatprep.subr.mxu0 %v570
        %1075 = vmatpush1.msra.mxu0 %v569
        %1076 = vmatprep.subr.mxu0 %v576
        %1077 = vmatpush1.msra.mxu0 %v575
        %1078 = vmatprep.subr.mxu0 %v582
        %1079 = vmatpush1.msra.mxu0 %v581
        %1080 = vmatprep.subr.mxu0 %v588
        %1081 = vmatpush1.msra.mxu0 %v587
        %1082 = vmatprep.subr.mxu0 %v594
        %1083 = vmatpush1.msra.mxu0 %v593
        %1084 = vmatprep.subr.mxu0 %v600
        %1085 = vmatpush1.msra.mxu0 %v599
        %1086 = vmatprep.subr.mxu0 %v606
        %1087 = vmatpush1.msra.mxu0 %v605
        %1088 = vmatprep.subr.mxu0 %v612
        %1089 = vmatpush1.msra.mxu0 %v611
        %1090 = vmatprep.subr.mxu0 %v618
        %1091 = vmatpush1.msra.mxu0 %v617
        %1092 = vmatprep.subr.mxu0 %v624
        %1093 = vmatpush1.msra.mxu0 %v623
        %1094 = vmatprep.subr.mxu0 %v630
        %1095 = vmatpush1.msra.mxu0 %v629
        %1096 = vmatprep.subr.mxu0 %v636
        %1097 = vmatpush1.msra.mxu0 %v635
        %1098 = vmatprep.subr.mxu0 %v642
        %1099 = vmatpush1.msra.mxu0 %v641
        %1100 = vmatprep.subr.mxu0 %v648
        %1101 = vmatpush1.msra.mxu0 %v647
        %1102 = vmatprep.subr.mxu0 %v654
        %1103 = vmatpush1.msra.mxu0 %v653
        %1104 = vmatprep.mubr.f32.mxu0 %v264
        %1105 = vmatmul.mubr.f32.gmra.mrb[0].mxu0 %v263
        %v1106 = vpop.f32.mrb[0].mxu0
        %v1107 = vadd.f32 0.0, %v1106
        %v1108 = vpop.f32.mrb[0].mxu0
        %v1109 = vadd.f32 0.0, %v1108
        %1110 = vmatprep.mubr.f32.mxu0 %v266
        %1111 = vmatmul.mubr.f32.gmra.mrb[0].mxu0 %v265
        %v1112 = vpop.f32.mrb[0].mxu0
        %v1113 = vadd.f32 0.0, %v1112
        %v1114 = vpop.f32.mrb[0].mxu0
        %v1115 = vadd.f32 0.0, %v1114
        %1116 = vdwg.mxu0
        %1117 = vmatprep.subr.mxu0 %v272
        %1118 = vmatpush1.msra.mxu0 %v271
        %1119 = vmatprep.subr.mxu0 %v278
        %1120 = vmatpush1.msra.mxu0 %v277
        %1121 = vmatprep.subr.mxu0 %v284
        %1122 = vmatpush1.msra.mxu0 %v283
        %1123 = vmatprep.subr.mxu0 %v290
        %1124 = vmatpush1.msra.mxu0 %v289
        %1125 = vmatprep.subr.mxu0 %v296
        %1126 = vmatpush1.msra.mxu0 %v295
        %1127 = vmatprep.subr.mxu0 %v302
        %1128 = vmatpush1.msra.mxu0 %v301
        %1129 = vmatprep.subr.mxu0 %v308
        %1130 = vmatpush1.msra.mxu0 %v307
        %1131 = vmatprep.subr.mxu0 %v314
        %1132 = vmatpush1.msra.mxu0 %v313
        %1133 = vmatprep.subr.mxu0 %v320
        %1134 = vmatpush1.msra.mxu0 %v319
        %1135 = vmatprep.subr.mxu0 %v326
        %1136 = vmatpush1.msra.mxu0 %v325
        %1137 = vmatprep.subr.mxu0 %v332
        %1138 = vmatpush1.msra.mxu0 %v331
        %1139 = vmatprep.subr.mxu0 %v338
        %1140 = vmatpush1.msra.mxu0 %v337
        %1141 = vmatprep.subr.mxu0 %v344
        %1142 = vmatpush1.msra.mxu0 %v343
        %1143 = vmatprep.subr.mxu0 %v350
        %1144 = vmatpush1.msra.mxu0 %v349
        %1145 = vmatprep.subr.mxu0 %v356
        %1146 = vmatpush1.msra.mxu0 %v355
        %1147 = vmatprep.subr.mxu0 %v362
        %1148 = vmatpush1.msra.mxu0 %v361
        %1149 = vmatprep.subr.mxu0 %v368
        %1150 = vmatpush1.msra.mxu0 %v367
        %1151 = vmatprep.subr.mxu0 %v374
        %1152 = vmatpush1.msra.mxu0 %v373
        %1153 = vmatprep.subr.mxu0 %v380
        %1154 = vmatpush1.msra.mxu0 %v379
        %1155 = vmatprep.subr.mxu0 %v386
        %1156 = vmatpush1.msra.mxu0 %v385
        %1157 = vmatprep.subr.mxu0 %v392
        %1158 = vmatpush1.msra.mxu0 %v391
        %1159 = vmatprep.subr.mxu0 %v398
        %1160 = vmatpush1.msra.mxu0 %v397
        %1161 = vmatprep.subr.mxu0 %v404
        %1162 = vmatpush1.msra.mxu0 %v403
        %1163 = vmatprep.subr.mxu0 %v410
        %1164 = vmatpush1.msra.mxu0 %v409
        %1165 = vmatprep.subr.mxu0 %v416
        %1166 = vmatpush1.msra.mxu0 %v415
        %1167 = vmatprep.subr.mxu0 %v422
        %1168 = vmatpush1.msra.mxu0 %v421
        %1169 = vmatprep.subr.mxu0 %v428
        %1170 = vmatpush1.msra.mxu0 %v427
        %1171 = vmatprep.subr.mxu0 %v434
        %1172 = vmatpush1.msra.mxu0 %v433
        %1173 = vmatprep.subr.mxu0 %v440
        %1174 = vmatpush1.msra.mxu0 %v439
        %1175 = vmatprep.subr.mxu0 %v446
        %1176 = vmatpush1.msra.mxu0 %v445
        %1177 = vmatprep.subr.mxu0 %v452
        %1178 = vmatpush1.msra.mxu0 %v451
        %1179 = vmatprep.subr.mxu0 %v458
        %1180 = vmatpush1.msra.mxu0 %v457
        %1181 = vmatprep.mubr.f32.mxu0 %v268
        %1182 = vmatmul.mubr.f32.gmra.mrb[0].mxu0 %v267
        %v1183 = vpop.f32.mrb[0].mxu0
        %v1184 = vadd.f32 0.0, %v1183
        %v1185 = vpop.f32.mrb[0].mxu0
        %v1186 = vadd.f32 0.0, %v1185
        %1187 = vmatprep.mubr.f32.mxu0 %v270
        %1188 = vmatmul.mubr.f32.gmra.mrb[0].mxu0 %v269
        %v1189 = vpop.f32.mrb[0].mxu0
        %v1190 = vadd.f32 0.0, %v1189
        %v1191 = vpop.f32.mrb[0].mxu0
        %v1192 = vadd.f32 0.0, %v1191
        %1193 = vdwg.mxu0
        %1194 = vmatprep.subr.mxu0 %v274
        %1195 = vmatpush1.msra.mxu0 %v273
        %1196 = vmatprep.subr.mxu0 %v280
        %1197 = vmatpush1.msra.mxu0 %v279
        %1198 = vmatprep.subr.mxu0 %v286
        %1199 = vmatpush1.msra.mxu0 %v285
        %1200 = vmatprep.subr.mxu0 %v292
        %1201 = vmatpush1.msra.mxu0 %v291
        %1202 = vmatprep.subr.mxu0 %v298
        %1203 = vmatpush1.msra.mxu0 %v297
        %1204 = vmatprep.subr.mxu0 %v304
        %1205 = vmatpush1.msra.mxu0 %v303
        %1206 = vmatprep.subr.mxu0 %v310
        %1207 = vmatpush1.msra.mxu0 %v309
        %1208 = vmatprep.subr.mxu0 %v316
        %1209 = vmatpush1.msra.mxu0 %v315
        %1210 = vmatprep.subr.mxu0 %v322
        %1211 = vmatpush1.msra.mxu0 %v321
        %1212 = vmatprep.subr.mxu0 %v328
        %1213 = vmatpush1.msra.mxu0 %v327
        %1214 = vmatprep.subr.mxu0 %v334
        %1215 = vmatpush1.msra.mxu0 %v333
        %1216 = vmatprep.subr.mxu0 %v340
        %1217 = vmatpush1.msra.mxu0 %v339
        %1218 = vmatprep.subr.mxu0 %v346
        %1219 = vmatpush1.msra.mxu0 %v345
        %1220 = vmatprep.subr.mxu0 %v352
        %1221 = vmatpush1.msra.mxu0 %v351
        %1222 = vmatprep.subr.mxu0 %v358
        %1223 = vmatpush1.msra.mxu0 %v357
        %1224 = vmatprep.subr.mxu0 %v364
        %1225 = vmatpush1.msra.mxu0 %v363
        %1226 = vmatprep.subr.mxu0 %v370
        %1227 = vmatpush1.msra.mxu0 %v369
        %1228 = vmatprep.subr.mxu0 %v376
        %1229 = vmatpush1.msra.mxu0 %v375
        %1230 = vmatprep.subr.mxu0 %v382
        %1231 = vmatpush1.msra.mxu0 %v381
        %1232 = vmatprep.subr.mxu0 %v388
        %1233 = vmatpush1.msra.mxu0 %v387
        %1234 = vmatprep.subr.mxu0 %v394
        %1235 = vmatpush1.msra.mxu0 %v393
        %1236 = vmatprep.subr.mxu0 %v400
        %1237 = vmatpush1.msra.mxu0 %v399
        %1238 = vmatprep.subr.mxu0 %v406
        %1239 = vmatpush1.msra.mxu0 %v405
        %1240 = vmatprep.subr.mxu0 %v412
        %1241 = vmatpush1.msra.mxu0 %v411
        %1242 = vmatprep.subr.mxu0 %v418
        %1243 = vmatpush1.msra.mxu0 %v417
        %1244 = vmatprep.subr.mxu0 %v424
        %1245 = vmatpush1.msra.mxu0 %v423
        %1246 = vmatprep.subr.mxu0 %v430
        %1247 = vmatpush1.msra.mxu0 %v429
        %1248 = vmatprep.subr.mxu0 %v436
        %1249 = vmatpush1.msra.mxu0 %v435
        %1250 = vmatprep.subr.mxu0 %v442
        %1251 = vmatpush1.msra.mxu0 %v441
        %1252 = vmatprep.subr.mxu0 %v448
        %1253 = vmatpush1.msra.mxu0 %v447
        %1254 = vmatprep.subr.mxu0 %v454
        %1255 = vmatpush1.msra.mxu0 %v453
        %1256 = vmatprep.subr.mxu0 %v460
        %1257 = vmatpush1.msra.mxu0 %v459
        %1258 = vmatprep.mubr.f32.mxu0 %v268
        %1259 = vmatmul.mubr.f32.gmra.mrb[0].mxu0 %v267
        %v1260 = vpop.f32.mrb[0].mxu0
        %v1261 = vadd.f32 0.0, %v1260
        %v1262 = vpop.f32.mrb[0].mxu0
        %v1263 = vadd.f32 0.0, %v1262
        %1264 = vmatprep.mubr.f32.mxu0 %v270
        %1265 = vmatmul.mubr.f32.gmra.mrb[0].mxu0 %v269
        %v1266 = vpop.f32.mrb[0].mxu0
        %v1267 = vadd.f32 0.0, %v1266
        %v1268 = vpop.f32.mrb[0].mxu0
        %v1269 = vadd.f32 0.0, %v1268
        %1270 = vdwg.mxu0
        %1271 = vmatprep.subr.mxu0 %v276
        %1272 = vmatpush1.msra.mxu0 %v275
        %1273 = vmatprep.subr.mxu0 %v282
        %1274 = vmatpush1.msra.mxu0 %v281
        %1275 = vmatprep.subr.mxu0 %v288
        %1276 = vmatpush1.msra.mxu0 %v287
        %1277 = vmatprep.subr.mxu0 %v294
        %1278 = vmatpush1.msra.mxu0 %v293
        %1279 = vmatprep.subr.mxu0 %v300
        %1280 = vmatpush1.msra.mxu0 %v299
        %1281 = vmatprep.subr.mxu0 %v306
        %1282 = vmatpush1.msra.mxu0 %v305
        %1283 = vmatprep.subr.mxu0 %v312
        %1284 = vmatpush1.msra.mxu0 %v311
        %1285 = vmatprep.subr.mxu0 %v318
        %1286 = vmatpush1.msra.mxu0 %v317
        %1287 = vmatprep.subr.mxu0 %v324
        %1288 = vmatpush1.msra.mxu0 %v323
        %1289 = vmatprep.subr.mxu0 %v330
        %1290 = vmatpush1.msra.mxu0 %v329
        %1291 = vmatprep.subr.mxu0 %v336
        %1292 = vmatpush1.msra.mxu0 %v335
        %1293 = vmatprep.subr.mxu0 %v342
        %1294 = vmatpush1.msra.mxu0 %v341
        %1295 = vmatprep.subr.mxu0 %v348
        %1296 = vmatpush1.msra.mxu0 %v347
        %1297 = vmatprep.subr.mxu0 %v354
        %1298 = vmatpush1.msra.mxu0 %v353
        %1299 = vmatprep.subr.mxu0 %v360
        %1300 = vmatpush1.msra.mxu0 %v359
        %1301 = vmatprep.subr.mxu0 %v366
        %1302 = vmatpush1.msra.mxu0 %v365
        %1303 = vmatprep.subr.mxu0 %v372
        %1304 = vmatpush1.msra.mxu0 %v371
        %1305 = vmatprep.subr.mxu0 %v378
        %1306 = vmatpush1.msra.mxu0 %v377
        %1307 = vmatprep.subr.mxu0 %v384
        %1308 = vmatpush1.msra.mxu0 %v383
        %1309 = vmatprep.subr.mxu0 %v390
        %1310 = vmatpush1.msra.mxu0 %v389
        %1311 = vmatprep.subr.mxu0 %v396
        %1312 = vmatpush1.msra.mxu0 %v395
        %1313 = vmatprep.subr.mxu0 %v402
        %1314 = vmatpush1.msra.mxu0 %v401
        %1315 = vmatprep.subr.mxu0 %v408
        %1316 = vmatpush1.msra.mxu0 %v407
        %1317 = vmatprep.subr.mxu0 %v414
        %1318 = vmatpush1.msra.mxu0 %v413
        %1319 = vmatprep.subr.mxu0 %v420
        %1320 = vmatpush1.msra.mxu0 %v419
        %1321 = vmatprep.subr.mxu0 %v426
        %1322 = vmatpush1.msra.mxu0 %v425
        %1323 = vmatprep.subr.mxu0 %v432
        %1324 = vmatpush1.msra.mxu0 %v431
        %1325 = vmatprep.subr.mxu0 %v438
        %1326 = vmatpush1.msra.mxu0 %v437
        %1327 = vmatprep.subr.mxu0 %v444
        %1328 = vmatpush1.msra.mxu0 %v443
        %1329 = vmatprep.subr.mxu0 %v450
        %1330 = vmatpush1.msra.mxu0 %v449
        %1331 = vmatprep.subr.mxu0 %v456
        %1332 = vmatpush1.msra.mxu0 %v455
        %1333 = vmatprep.subr.mxu0 %v462
        %1334 = vmatpush1.msra.mxu0 %v461
        %1335 = vmatprep.mubr.f32.mxu0 %v268
        %1336 = vmatmul.mubr.f32.gmra.mrb[0].mxu0 %v267
        %v1337 = vpop.f32.mrb[0].mxu0
        %v1338 = vadd.f32 0.0, %v1337
        %v1339 = vpop.f32.mrb[0].mxu0
        %v1340 = vadd.f32 0.0, %v1339
        %1341 = vmatprep.mubr.f32.mxu0 %v270
        %1342 = vmatmul.mubr.f32.gmra.mrb[0].mxu0 %v269
        %v1343 = vpop.f32.mrb[0].mxu0
        %v1344 = vadd.f32 0.0, %v1343
        %v1345 = vpop.f32.mrb[0].mxu0
        %v1346 = vadd.f32 0.0, %v1345
        %1347 = vdwg.mxu0
        %1348 = vmatprep.subr.mxu0 %v464
        %1349 = vmatpush1.msra.mxu0 %v463
        %1350 = vmatprep.subr.mxu0 %v470
        %1351 = vmatpush1.msra.mxu0 %v469
        %1352 = vmatprep.subr.mxu0 %v476
        %1353 = vmatpush1.msra.mxu0 %v475
        %1354 = vmatprep.subr.mxu0 %v482
        %1355 = vmatpush1.msra.mxu0 %v481
        %1356 = vmatprep.subr.mxu0 %v488
        %1357 = vmatpush1.msra.mxu0 %v487
        %1358 = vmatprep.subr.mxu0 %v494
        %1359 = vmatpush1.msra.mxu0 %v493
        %1360 = vmatprep.subr.mxu0 %v500
        %1361 = vmatpush1.msra.mxu0 %v499
        %1362 = vmatprep.subr.mxu0 %v506
        %1363 = vmatpush1.msra.mxu0 %v505
        %1364 = vmatprep.subr.mxu0 %v512
        %1365 = vmatpush1.msra.mxu0 %v511
        %1366 = vmatprep.subr.mxu0 %v518
        %1367 = vmatpush1.msra.mxu0 %v517
        %1368 = vmatprep.subr.mxu0 %v524
        %1369 = vmatpush1.msra.mxu0 %v523
        %1370 = vmatprep.subr.mxu0 %v530
        %1371 = vmatpush1.msra.mxu0 %v529
        %1372 = vmatprep.subr.mxu0 %v536
        %1373 = vmatpush1.msra.mxu0 %v535
        %1374 = vmatprep.subr.mxu0 %v542
        %1375 = vmatpush1.msra.mxu0 %v541
        %1376 = vmatprep.subr.mxu0 %v548
        %1377 = vmatpush1.msra.mxu0 %v547
        %1378 = vmatprep.subr.mxu0 %v554
        %1379 = vmatpush1.msra.mxu0 %v553
        %1380 = vmatprep.subr.mxu0 %v560
        %1381 = vmatpush1.msra.mxu0 %v559
        %1382 = vmatprep.subr.mxu0 %v566
        %1383 = vmatpush1.msra.mxu0 %v565
        %1384 = vmatprep.subr.mxu0 %v572
        %1385 = vmatpush1.msra.mxu0 %v571
        %1386 = vmatprep.subr.mxu0 %v578
        %1387 = vmatpush1.msra.mxu0 %v577
        %1388 = vmatprep.subr.mxu0 %v584
        %1389 = vmatpush1.msra.mxu0 %v583
        %1390 = vmatprep.subr.mxu0 %v590
        %1391 = vmatpush1.msra.mxu0 %v589
        %1392 = vmatprep.subr.mxu0 %v596
        %1393 = vmatpush1.msra.mxu0 %v595
        %1394 = vmatprep.subr.mxu0 %v602
        %1395 = vmatpush1.msra.mxu0 %v601
        %1396 = vmatprep.subr.mxu0 %v608
        %1397 = vmatpush1.msra.mxu0 %v607
        %1398 = vmatprep.subr.mxu0 %v614
        %1399 = vmatpush1.msra.mxu0 %v613
        %1400 = vmatprep.subr.mxu0 %v620
        %1401 = vmatpush1.msra.mxu0 %v619
        %1402 = vmatprep.subr.mxu0 %v626
        %1403 = vmatpush1.msra.mxu0 %v625
        %1404 = vmatprep.subr.mxu0 %v632
        %1405 = vmatpush1.msra.mxu0 %v631
        %1406 = vmatprep.subr.mxu0 %v638
        %1407 = vmatpush1.msra.mxu0 %v637
        %1408 = vmatprep.subr.mxu0 %v644
        %1409 = vmatpush1.msra.mxu0 %v643
        %1410 = vmatprep.subr.mxu0 %v650
        %1411 = vmatpush1.msra.mxu0 %v649
        %1412 = vmatprep.mubr.f32.mxu0 %v268
        %1413 = vmatmul.mubr.f32.gmra.mrb[0].mxu0 %v267
        %v1414 = vpop.f32.mrb[0].mxu0
        %v1415 = vadd.f32 0.0, %v1414
        %v1416 = vpop.f32.mrb[0].mxu0
        %v1417 = vadd.f32 0.0, %v1416
        %1418 = vmatprep.mubr.f32.mxu0 %v270
        %1419 = vmatmul.mubr.f32.gmra.mrb[0].mxu0 %v269
        %v1420 = vpop.f32.mrb[0].mxu0
        %v1421 = vadd.f32 0.0, %v1420
        %v1422 = vpop.f32.mrb[0].mxu0
        %v1423 = vadd.f32 0.0, %v1422
        %1424 = vdwg.mxu0
        %1425 = vmatprep.subr.mxu0 %v466
        %1426 = vmatpush1.msra.mxu0 %v465
        %1427 = vmatprep.subr.mxu0 %v472
        %1428 = vmatpush1.msra.mxu0 %v471
        %1429 = vmatprep.subr.mxu0 %v478
        %1430 = vmatpush1.msra.mxu0 %v477
        %1431 = vmatprep.subr.mxu0 %v484
        %1432 = vmatpush1.msra.mxu0 %v483
        %1433 = vmatprep.subr.mxu0 %v490
        %1434 = vmatpush1.msra.mxu0 %v489
        %1435 = vmatprep.subr.mxu0 %v496
        %1436 = vmatpush1.msra.mxu0 %v495
        %1437 = vmatprep.subr.mxu0 %v502
        %1438 = vmatpush1.msra.mxu0 %v501
        %1439 = vmatprep.subr.mxu0 %v508
        %1440 = vmatpush1.msra.mxu0 %v507
        %1441 = vmatprep.subr.mxu0 %v514
        %1442 = vmatpush1.msra.mxu0 %v513
        %1443 = vmatprep.subr.mxu0 %v520
        %1444 = vmatpush1.msra.mxu0 %v519
        %1445 = vmatprep.subr.mxu0 %v526
        %1446 = vmatpush1.msra.mxu0 %v525
        %1447 = vmatprep.subr.mxu0 %v532
        %1448 = vmatpush1.msra.mxu0 %v531
        %1449 = vmatprep.subr.mxu0 %v538
        %1450 = vmatpush1.msra.mxu0 %v537
        %1451 = vmatprep.subr.mxu0 %v544
        %1452 = vmatpush1.msra.mxu0 %v543
        %1453 = vmatprep.subr.mxu0 %v550
        %1454 = vmatpush1.msra.mxu0 %v549
        %1455 = vmatprep.subr.mxu0 %v556
        %1456 = vmatpush1.msra.mxu0 %v555
        %1457 = vmatprep.subr.mxu0 %v562
        %1458 = vmatpush1.msra.mxu0 %v561
        %1459 = vmatprep.subr.mxu0 %v568
        %1460 = vmatpush1.msra.mxu0 %v567
        %1461 = vmatprep.subr.mxu0 %v574
        %1462 = vmatpush1.msra.mxu0 %v573
        %1463 = vmatprep.subr.mxu0 %v580
        %1464 = vmatpush1.msra.mxu0 %v579
        %1465 = vmatprep.subr.mxu0 %v586
        %1466 = vmatpush1.msra.mxu0 %v585
        %1467 = vmatprep.subr.mxu0 %v592
        %1468 = vmatpush1.msra.mxu0 %v591
        %1469 = vmatprep.subr.mxu0 %v598
        %1470 = vmatpush1.msra.mxu0 %v597
        %1471 = vmatprep.subr.mxu0 %v604
        %1472 = vmatpush1.msra.mxu0 %v603
        %1473 = vmatprep.subr.mxu0 %v610
        %1474 = vmatpush1.msra.mxu0 %v609
        %1475 = vmatprep.subr.mxu0 %v616
        %1476 = vmatpush1.msra.mxu0 %v615
        %1477 = vmatprep.subr.mxu0 %v622
        %1478 = vmatpush1.msra.mxu0 %v621
        %1479 = vmatprep.subr.mxu0 %v628
        %1480 = vmatpush1.msra.mxu0 %v627
        %1481 = vmatprep.subr.mxu0 %v634
        %1482 = vmatpush1.msra.mxu0 %v633
        %1483 = vmatprep.subr.mxu0 %v640
        %1484 = vmatpush1.msra.mxu0 %v639
        %1485 = vmatprep.subr.mxu0 %v646
        %1486 = vmatpush1.msra.mxu0 %v645
        %1487 = vmatprep.subr.mxu0 %v652
        %1488 = vmatpush1.msra.mxu0 %v651
        %1489 = vmatprep.mubr.f32.mxu0 %v268
        %1490 = vmatmul.mubr.f32.gmra.mrb[0].mxu0 %v267
        %v1491 = vpop.f32.mrb[0].mxu0
        %v1492 = vadd.f32 0.0, %v1491
        %v1493 = vpop.f32.mrb[0].mxu0
        %v1494 = vadd.f32 0.0, %v1493
        %1495 = vmatprep.mubr.f32.mxu0 %v270
        %1496 = vmatmul.mubr.f32.gmra.mrb[0].mxu0 %v269
        %v1497 = vpop.f32.mrb[0].mxu0
        %v1498 = vadd.f32 0.0, %v1497
        %v1499 = vpop.f32.mrb[0].mxu0
        %v1500 = vadd.f32 0.0, %v1499
        %1501 = vdwg.mxu0
        %1502 = vmatprep.subr.mxu0 %v468
        %1503 = vmatpush1.msra.mxu0 %v467
        %1504 = vmatprep.subr.mxu0 %v474
        %1505 = vmatpush1.msra.mxu0 %v473
        %1506 = vmatprep.subr.mxu0 %v480
        %1507 = vmatpush1.msra.mxu0 %v479
        %1508 = vmatprep.subr.mxu0 %v486
        %1509 = vmatpush1.msra.mxu0 %v485
        %1510 = vmatprep.subr.mxu0 %v492
        %1511 = vmatpush1.msra.mxu0 %v491
        %1512 = vmatprep.subr.mxu0 %v498
        %1513 = vmatpush1.msra.mxu0 %v497
        %1514 = vmatprep.subr.mxu0 %v504
        %1515 = vmatpush1.msra.mxu0 %v503
        %1516 = vmatprep.subr.mxu0 %v510
        %1517 = vmatpush1.msra.mxu0 %v509
        %1518 = vmatprep.subr.mxu0 %v516
        %1519 = vmatpush1.msra.mxu0 %v515
        %1520 = vmatprep.subr.mxu0 %v522
        %1521 = vmatpush1.msra.mxu0 %v521
        %1522 = vmatprep.subr.mxu0 %v528
        %1523 = vmatpush1.msra.mxu0 %v527
        %1524 = vmatprep.subr.mxu0 %v534
        %1525 = vmatpush1.msra.mxu0 %v533
        %1526 = vmatprep.subr.mxu0 %v540
        %1527 = vmatpush1.msra.mxu0 %v539
        %1528 = vmatprep.subr.mxu0 %v546
        %1529 = vmatpush1.msra.mxu0 %v545
        %1530 = vmatprep.subr.mxu0 %v552
        %1531 = vmatpush1.msra.mxu0 %v551
        %1532 = vmatprep.subr.mxu0 %v558
        %1533 = vmatpush1.msra.mxu0 %v557
        %1534 = vmatprep.subr.mxu0 %v564
        %1535 = vmatpush1.msra.mxu0 %v563
        %1536 = vmatprep.subr.mxu0 %v570
        %1537 = vmatpush1.msra.mxu0 %v569
        %1538 = vmatprep.subr.mxu0 %v576
        %1539 = vmatpush1.msra.mxu0 %v575
        %1540 = vmatprep.subr.mxu0 %v582
        %1541 = vmatpush1.msra.mxu0 %v581
        %1542 = vmatprep.subr.mxu0 %v588
        %1543 = vmatpush1.msra.mxu0 %v587
        %1544 = vmatprep.subr.mxu0 %v594
        %1545 = vmatpush1.msra.mxu0 %v593
        %1546 = vmatprep.subr.mxu0 %v600
        %1547 = vmatpush1.msra.mxu0 %v599
        %1548 = vmatprep.subr.mxu0 %v606
        %1549 = vmatpush1.msra.mxu0 %v605
        %1550 = vmatprep.subr.mxu0 %v612
        %1551 = vmatpush1.msra.mxu0 %v611
        %1552 = vmatprep.subr.mxu0 %v618
        %1553 = vmatpush1.msra.mxu0 %v617
        %1554 = vmatprep.subr.mxu0 %v624
        %1555 = vmatpush1.msra.mxu0 %v623
        %1556 = vmatprep.subr.mxu0 %v630
        %1557 = vmatpush1.msra.mxu0 %v629
        %1558 = vmatprep.subr.mxu0 %v636
        %1559 = vmatpush1.msra.mxu0 %v635
        %1560 = vmatprep.subr.mxu0 %v642
        %1561 = vmatpush1.msra.mxu0 %v641
        %1562 = vmatprep.subr.mxu0 %v648
        %1563 = vmatpush1.msra.mxu0 %v647
        %1564 = vmatprep.subr.mxu0 %v654
        %1565 = vmatpush1.msra.mxu0 %v653
        %1566 = vmatprep.mubr.f32.mxu0 %v268
        %1567 = vmatmul.mubr.f32.gmra.mrb[0].mxu0 %v267
        %v1568 = vpop.f32.mrb[0].mxu0
        %v1569 = vadd.f32 0.0, %v1568
        %v1570 = vpop.f32.mrb[0].mxu0
        %v1571 = vadd.f32 0.0, %v1570
        %1572 = vmatprep.mubr.f32.mxu0 %v270
        %1573 = vmatmul.mubr.f32.gmra.mrb[0].mxu0 %v269
        %v1574 = vpop.f32.mrb[0].mxu0
        %v1575 = vadd.f32 0.0, %v1574
        %v1576 = vpop.f32.mrb[0].mxu0
        %v1577 = vadd.f32 0.0, %v1576
        %1578 = vdwg.mxu0
        %v1579 = vld [vmem:[#allocation3] sm:$0xff]
        %v1580 = vld [vmem:[#allocation3 + $0x8] sm:$0xf]
        %v1583 = vlaneseq
        %v1584 = vshrl.u32 %v1583, 7
        %v1585 = vsub.s32 0, %v1584
        %v1586 = vrot.slane %v1579, %v1585
        %v1587 = vlaneseq
        %v1588 = vshrl.u32 %v1587, 7
        %v1589 = vsub.s32 2, %v1588
        %v1590 = vrot.slane %v1579, %v1589
        %v1591 = vlaneseq
        %v1592 = vshrl.u32 %v1591, 7
        %v1593 = vsub.s32 4, %v1592
        %v1594 = vrot.slane %v1579, %v1593
        %v1595 = vlaneseq
        %v1596 = vshrl.u32 %v1595, 7
        %v1597 = vsub.s32 6, %v1596
        %v1598 = vrot.slane %v1579, %v1597
        %v1599 = vlaneseq
        %v1600 = vshrl.u32 %v1599, 7
        %v1601 = vsub.s32 0, %v1600
        %v1602 = vrot.slane %v1580, %v1601
        %v1603 = vlaneseq
        %v1604 = vshrl.u32 %v1603, 7
        %v1605 = vsub.s32 2, %v1604
        %v1606 = vrot.slane %v1580, %v1605
        %vm1625 = vcmask 1040384
        %v1626 = vrot.slane %v722, 7
        %v1627 = vrot.slane %v724, 7
        %v1628 = vrot.slane %v799, 7
        %v1629 = vrot.slane %v801, 7
        %v1630 = vrot.slane %v876, 7
        %v1631 = vrot.slane %v878, 7
        %v1632 = vrot.slane %v728, 7
        %v1633 = vsel %vm1625, %v1626, %v1632
        %v1634 = vrot.slane %v730, 7
        %v1635 = vsel %vm1625, %v1627, %v1634
        %v1636 = vrot.slane %v805, 7
        %v1637 = vsel %vm1625, %v1628, %v1636
        %v1638 = vrot.slane %v807, 7
        %v1639 = vsel %vm1625, %v1629, %v1638
        %v1640 = vrot.slane %v882, 7
        %v1641 = vsel %vm1625, %v1630, %v1640
        %v1642 = vrot.slane %v884, 7
        %v1643 = vsel %vm1625, %v1631, %v1642
        %v1656 = vsel %vm1625, %v1586, %v1626
        %v1657 = vsel %vm1625, %v1590, %v1627
        %v1658 = vsel %vm1625, %v1594, %v1628
        %v1659 = vsel %vm1625, %v1598, %v1629
        %v1660 = vsel %vm1625, %v1602, %v1630
        %v1661 = vsel %vm1625, %v1606, %v1631
        %v1662 = vadd.f32 %v1656, %v953
        %v1663 = vadd.f32 %v1657, %v955
        %v1664 = vadd.f32 %v1658, %v1030
        %v1665 = vadd.f32 %v1659, %v1032
        %v1666 = vadd.f32 %v1660, %v1107
        %v1667 = vadd.f32 %v1661, %v1109
        %v1668 = vadd.f32 %v1633, %v959
        %v1669 = vadd.f32 %v1635, %v961
        %v1670 = vadd.f32 %v1637, %v1036
        %v1671 = vadd.f32 %v1639, %v1038
        %v1672 = vadd.f32 %v1641, %v1113
        %v1673 = vadd.f32 %v1643, %v1115
        %v1674 = vlaneseq
        %v1675 = vshrl.u32 %v1674, 7
        %v1676 = vsub.s32 1, %v1675
        %v1677 = vrot.slane %v1579, %v1676
        %v1678 = vlaneseq
        %v1679 = vshrl.u32 %v1678, 7
        %v1680 = vsub.s32 3, %v1679
        %v1681 = vrot.slane %v1579, %v1680
        %v1682 = vlaneseq
        %v1683 = vshrl.u32 %v1682, 7
        %v1684 = vsub.s32 5, %v1683
        %v1685 = vrot.slane %v1579, %v1684
        %v1686 = vlaneseq
        %v1687 = vshrl.u32 %v1686, 7
        %v1688 = vsub.s32 7, %v1687
        %v1689 = vrot.slane %v1579, %v1688
        %v1690 = vlaneseq
        %v1691 = vshrl.u32 %v1690, 7
        %v1692 = vsub.s32 1, %v1691
        %v1693 = vrot.slane %v1580, %v1692
        %v1694 = vlaneseq
        %v1695 = vshrl.u32 %v1694, 7
        %v1696 = vsub.s32 3, %v1695
        %v1697 = vrot.slane %v1580, %v1696
        %v1716 = vrot.slane %v1184, 7
        %v1717 = vrot.slane %v1186, 7
        %v1718 = vrot.slane %v1261, 7
        %v1719 = vrot.slane %v1263, 7
        %v1720 = vrot.slane %v1338, 7
        %v1721 = vrot.slane %v1340, 7
        %v1722 = vrot.slane %v1190, 7
        %v1723 = vsel %vm1625, %v1716, %v1722
        %v1724 = vrot.slane %v1192, 7
        %v1725 = vsel %vm1625, %v1717, %v1724
        %v1726 = vrot.slane %v1267, 7
        %v1727 = vsel %vm1625, %v1718, %v1726
        %v1728 = vrot.slane %v1269, 7
        %v1729 = vsel %vm1625, %v1719, %v1728
        %v1730 = vrot.slane %v1344, 7
        %v1731 = vsel %vm1625, %v1720, %v1730
        %v1732 = vrot.slane %v1346, 7
        %v1733 = vsel %vm1625, %v1721, %v1732
        %v1746 = vsel %vm1625, %v1677, %v1716
        %v1747 = vsel %vm1625, %v1681, %v1717
        %v1748 = vsel %vm1625, %v1685, %v1718
        %v1749 = vsel %vm1625, %v1689, %v1719
        %v1750 = vsel %vm1625, %v1693, %v1720
        %v1751 = vsel %vm1625, %v1697, %v1721
        %v1752 = vadd.f32 %v1746, %v1415
        %v1753 = vadd.f32 %v1747, %v1417
        %v1754 = vadd.f32 %v1748, %v1492
        %v1755 = vadd.f32 %v1749, %v1494
        %v1756 = vadd.f32 %v1750, %v1569
        %v1757 = vadd.f32 %v1751, %v1571
        %v1758 = vadd.f32 %v1723, %v1421
        %v1759 = vadd.f32 %v1725, %v1423
        %v1760 = vadd.f32 %v1727, %v1498
        %v1761 = vadd.f32 %v1729, %v1500
        %v1762 = vadd.f32 %v1731, %v1575
        %v1763 = vadd.f32 %v1733, %v1577
        %v1770 = vrot.slane %v1190, 6
        %v1771 = vrot.slane %v1192, 6
        %v1772 = vrot.slane %v1267, 6
        %v1773 = vrot.slane %v1269, 6
        %v1774 = vrot.slane %v1344, 6
        %v1775 = vrot.slane %v1346, 6
        %v1782 = vsel %vm1625, %v1632, %v1770
        %v1783 = vsel %vm1625, %v1634, %v1771
        %v1784 = vsel %vm1625, %v1636, %v1772
        %v1785 = vsel %vm1625, %v1638, %v1773
        %v1786 = vsel %vm1625, %v1640, %v1774
        %v1787 = vsel %vm1625, %v1642, %v1775
        %v1794 = vcombine.low %v1782, %v1783
        %v1795 = vcombine.low %v1784, %v1785
        %v1797 = vunpack.c.l.s4 1983009808
        %v1798 = vunpack.c.0.s8 %v1797
        %v1799 = vlaneseq
        %v1800 = vshrl.u32 %v1799, 7
        %v1801 = vsub.s32 %v1798, %v1800
        %v1802 = vrot.slane %v1794, %v1801
        %v1804 = vunpack.c.l.s4 1983009808
        %v1805 = vunpack.c.0.s8 %v1804
        %v1806 = vlaneseq
        %v1807 = vshrl.u32 %v1806, 7
        %v1808 = vsub.s32 %v1805, %v1807
        %v1809 = vrot.slane %v1795, %v1808
        %v1810 = vcombine.low %v1802, %v1809
        %v1811 = vcombine.low %v1786, %v1787
        %v1813 = vunpack.c.l.s4 1983009808
        %v1814 = vunpack.c.0.s8 %v1813
        %v1815 = vlaneseq
        %v1816 = vshrl.u32 %v1815, 7
        %v1817 = vsub.s32 %v1814, %v1816
        %v1818 = vrot.slane %v1811, %v1817
        %1821 = vst [vmem:[#allocation3] sm:$0xff] %v1810
        %1822 = vst [vmem:[#allocation3 + $0x8] sm:$0xf] %v1818
        %v1823 = vmul.f32 %v1662, %v1662
        %v1824 = vmul.f32 %v1663, %v1663
        %v1825 = vmul.f32 %v1664, %v1664
        %v1826 = vmul.f32 %v1668, %v1668
        %v1827 = vmul.f32 %v1669, %v1669
        %v1828 = vmul.f32 %v1670, %v1670
        %v1829 = vmul.f32 %v1665, %v1665
        %v1830 = vmul.f32 %v1666, %v1666
        %v1831 = vmul.f32 %v1667, %v1667
        %v1832 = vmul.f32 %v1671, %v1671
        %v1833 = vmul.f32 %v1672, %v1672
        %v1834 = vmul.f32 %v1673, %v1673
        %v1835 = vadd.f32 %v1823, %v1829
        %v1836 = vadd.f32 %v1824, %v1830
        %v1837 = vadd.f32 %v1825, %v1831
        %v1838 = vadd.f32 %v1826, %v1832
        %v1839 = vadd.f32 %v1827, %v1833
        %v1840 = vadd.f32 %v1828, %v1834
        %v1841 = vmul.f32 %v1752, %v1752
        %v1842 = vmul.f32 %v1753, %v1753
        %v1843 = vmul.f32 %v1754, %v1754
        %v1844 = vmul.f32 %v1758, %v1758
        %v1845 = vmul.f32 %v1759, %v1759
        %v1846 = vmul.f32 %v1760, %v1760
        %v1847 = vmul.f32 %v1755, %v1755
        %v1848 = vmul.f32 %v1756, %v1756
        %v1849 = vmul.f32 %v1757, %v1757
        %v1850 = vmul.f32 %v1761, %v1761
        %v1851 = vmul.f32 %v1762, %v1762
        %v1852 = vmul.f32 %v1763, %v1763
        %v1853 = vadd.f32 %v1841, %v1847
        %v1854 = vadd.f32 %v1842, %v1848
        %v1855 = vadd.f32 %v1843, %v1849
        %v1856 = vadd.f32 %v1844, %v1850
        %v1857 = vadd.f32 %v1845, %v1851
        %v1858 = vadd.f32 %v1846, %v1852
        %v1859 = vlaneseq
        %v1860 = vshrl.u32 %v1859, 7
        %v1861 = vadd.s32 %v1860, 8
        %s1862 = smul.u32 %s21, 16
        %s1863 = ssub.s32 %s1862, 1
        %v1864 = vstv %s1863
        %v1865 = vadd.s32 %v1860, %v1864
        %v1866 = vadd.s32 %v1861, %v1864
        %vm1867 = vcmp.ge.s32.totalorder %v1865, 0
        %vm1868 = vcmp.ge.s32.totalorder %v1866, 0
        %vm1869 = vcmp.lt.s32.totalorder %v1865, 9
        %vm1870 = vcmp.lt.s32.totalorder %v1866, 9
        %vm1871 = vmand %vm1867, %vm1869
        %vm1872 = vmand %vm1868, %vm1870
        %v1873 = vsel %vm1871, 1, 0
        %v1874 = vsel %vm1872, 1, 0
        %vm1875 = vcmp.eq.s32.totalorder %v1873, 1
        %vm1876 = vcmp.eq.s32.totalorder %v1874, 1
        %v1877 = vsel %vm1875, %v1835, 0.0
        %v1878 = vsel %vm1875, %v1836, 0.0
        %v1879 = vsel %vm1875, %v1837, 0.0
        %v1880 = vsel %vm1876, %v1838, 0.0
        %v1881 = vsel %vm1876, %v1839, 0.0
        %v1882 = vsel %vm1876, %v1840, 0.0
        %v1883 = vsel %vm1875, %v1853, 0.0
        %v1884 = vsel %vm1875, %v1854, 0.0
        %v1885 = vsel %vm1875, %v1855, 0.0
        %v1886 = vsel %vm1876, %v1856, 0.0
        %v1887 = vsel %vm1876, %v1857, 0.0
        %v1888 = vsel %vm1876, %v1858, 0.0
        %s1889 = sld [smem:[#allocation2]]
        %v1890 = vadd.f32 %v1877, %v1878
        %v1891 = vadd.f32 %v1890, %v1879
        %v1892 = vadd.f32 %v1891, %v1880
        %v1893 = vadd.f32 %v1892, %v1881
        %v1894 = vadd.f32 %v1893, %v1882
        %1895 = vadd.xlane.f32.xlu0 %v1894
        %v1896 = vpop.xlane.xlu0 %1895
        %v1897 = vrot.slane %v1896, 4
        %v1898 = vadd.f32 %v1896, %v1897
        %v1899 = vrot.slane %v1898, 2
        %v1900 = vadd.f32 %v1898, %v1899
        %v1901 = vrot.slane %v1900, 1
        %v1902 = vadd.f32 %v1900, %v1901
        %s1903 = vtos %v1902
        %s1904 = sadd.f32 %s1889, %s1903
        %s1905 = scalar_lea.smem [#allocation2], 0
        %1906 = sst [smem:[%s1905]] %s1904
        %s1907 = sld [smem:[#allocation2 + $0x1]]
        %v1908 = vadd.f32 %v1883, %v1884
        %v1909 = vadd.f32 %v1908, %v1885
        %v1910 = vadd.f32 %v1909, %v1886
        %v1911 = vadd.f32 %v1910, %v1887
        %v1912 = vadd.f32 %v1911, %v1888
        %1913 = vadd.xlane.f32.xlu0 %v1912
        %v1914 = vpop.xlane.xlu0 %1913
        %v1915 = vrot.slane %v1914, 4
        %v1916 = vadd.f32 %v1914, %v1915
        %v1917 = vrot.slane %v1916, 2
        %v1918 = vadd.f32 %v1916, %v1917
        %v1919 = vrot.slane %v1918, 1
        %v1920 = vadd.f32 %v1918, %v1919
        %s1921 = vtos %v1920
        %s1922 = sadd.f32 %s1907, %s1921
        %s1923 = scalar_lea.smem [#allocation2], 1
        %1924 = sst [smem:[%s1923]] %s1922
        %s1925 = sld [smem:[#allocation2 + $0x2]]
        %v1926 = vmul.f32 %v1877, %v1877
        %v1927 = vmul.f32 %v1878, %v1878
        %v1928 = vmul.f32 %v1879, %v1879
        %v1929 = vmul.f32 %v1880, %v1880
        %v1930 = vmul.f32 %v1881, %v1881
        %v1931 = vmul.f32 %v1882, %v1882
        %v1932 = vadd.f32 %v1926, %v1927
        %v1933 = vadd.f32 %v1932, %v1928
        %v1934 = vadd.f32 %v1933, %v1929
        %v1935 = vadd.f32 %v1934, %v1930
        %v1936 = vadd.f32 %v1935, %v1931
        %1937 = vadd.xlane.f32.xlu0 %v1936
        %v1938 = vpop.xlane.xlu0 %1937
        %v1939 = vrot.slane %v1938, 4
        %v1940 = vadd.f32 %v1938, %v1939
        %v1941 = vrot.slane %v1940, 2
        %v1942 = vadd.f32 %v1940, %v1941
        %v1943 = vrot.slane %v1942, 1
        %v1944 = vadd.f32 %v1942, %v1943
        %s1945 = vtos %v1944
        %s1946 = sadd.f32 %s1925, %s1945
        %s1947 = scalar_lea.smem [#allocation2], 2
        %1948 = sst [smem:[%s1947]] %s1946
        %s1949 = sld [smem:[#allocation2 + $0x3]]
        %v1950 = vmul.f32 %v1883, %v1883
        %v1951 = vmul.f32 %v1884, %v1884
        %v1952 = vmul.f32 %v1885, %v1885
        %v1953 = vmul.f32 %v1886, %v1886
        %v1954 = vmul.f32 %v1887, %v1887
        %v1955 = vmul.f32 %v1888, %v1888
        %v1956 = vadd.f32 %v1950, %v1951
        %v1957 = vadd.f32 %v1956, %v1952
        %v1958 = vadd.f32 %v1957, %v1953
        %v1959 = vadd.f32 %v1958, %v1954
        %v1960 = vadd.f32 %v1959, %v1955
        %1961 = vadd.xlane.f32.xlu0 %v1960
        %v1962 = vpop.xlane.xlu0 %1961
        %v1963 = vrot.slane %v1962, 4
        %v1964 = vadd.f32 %v1962, %v1963
        %v1965 = vrot.slane %v1964, 2
        %v1966 = vadd.f32 %v1964, %v1965
        %v1967 = vrot.slane %v1966, 1
        %v1968 = vadd.f32 %v1966, %v1967
        %s1969 = vtos %v1968
        %s1970 = sadd.f32 %s1949, %s1969
        %s1971 = scalar_lea.smem [#allocation2], 3
        %1972 = sst [smem:[%s1971]] %s1970
        %s1973 = sld [smem:[#allocation2 + $0x4]]
        %v1974 = vmul.f32 %v1877, %v1883
        %v1975 = vmul.f32 %v1878, %v1884
        %v1976 = vmul.f32 %v1879, %v1885
        %v1977 = vmul.f32 %v1880, %v1886
        %v1978 = vmul.f32 %v1881, %v1887
        %v1979 = vmul.f32 %v1882, %v1888
        %v1980 = vadd.f32 %v1974, %v1975
        %v1981 = vadd.f32 %v1980, %v1976
        %v1982 = vadd.f32 %v1981, %v1977
        %v1983 = vadd.f32 %v1982, %v1978
        %v1984 = vadd.f32 %v1983, %v1979
        %1985 = vadd.xlane.f32.xlu0 %v1984
        %v1986 = vpop.xlane.xlu0 %1985
        %v1987 = vrot.slane %v1986, 4
        %v1988 = vadd.f32 %v1986, %v1987
        %v1989 = vrot.slane %v1988, 2
        %v1990 = vadd.f32 %v1988, %v1989
        %v1991 = vrot.slane %v1990, 1
        %v1992 = vadd.f32 %v1990, %v1991
        %s1993 = vtos %v1992
        %s1994 = sadd.f32 %s1973, %s1993
        %s1995 = scalar_lea.smem [#allocation2], 4
        %1996 = sst [smem:[%s1995]] %s1994
        %p1997 = scmp.eq.s32.totalorder %s20, 1
        %p1998 = pnand %p1997, %p243
        %p1999 = pneg %p1998
        // Predicated region
        $region45: #{spectrogram_loss.1} parent=31 // pred_check
          _
        $region46: #{spectrogram_loss.1} parent=31 // pred_check_branch
          %2001 = sbr.rel (%p1998) target = $region48
        $region47: #{spectrogram_loss.1} parent=31 // pred_region
          %s2002 = sld [smem:[#allocation2]]
          %s2003 = sld [smem:[#allocation2 + $0x1]]
          %s2004 = sld [smem:[#allocation2 + $0x2]]
          %s2005 = sld [smem:[#allocation2 + $0x3]]
          %s2006 = sld [smem:[#allocation2 + $0x4]]
          %v2007 = vrcp.pop 4626.0
          %s2008 = vtos %v2007
          %s2009 = smul.f32 %s2002, %s2008
          %v2010 = vrcp.pop 4626.0
          %s2011 = vtos %v2010
          %s2012 = smul.f32 %s2003, %s2011
          %s2013 = smul.f32 %s2009, 4626.0
          %s2014 = smul.f32 %s2013, %s2009
          %s2015 = ssub.f32 %s2004, %s2014
          %s2016 = smul.f32 %s2012, 4626.0
          %s2017 = smul.f32 %s2016, %s2012
          %s2018 = ssub.f32 %s2005, %s2017
          %s2019 = smul.f32 %s2013, %s2012
          %s2020 = ssub.f32 %s2006, %s2019
          %v2021 = vrcp.pop 4625.0
          %s2022 = vtos %v2021
          %s2023 = smul.f32 %s2015, %s2022
          %v2024 = vstv %s2023
          %v2025 = vrsqrt.pop %v2024
          %v2026 = vmul.f32 %v2024, %v2025
          %vm2027 = vcmp.eq.f32.partialorder %v2024, inf
          %v2028 = vsel %vm2027, %v2024, %v2026
          %vm2029 = vcmp.eq.f32.partialorder %v2024, 0.0
          %v2030 = vand.u32 %v2024, 2147483648
          %v2031 = vsel %vm2029, %v2030, %v2028
          %s2032 = vtos %v2031
          %s2033 = sadd.f32 %s2032, 1e-06
          %v2034 = vrcp.pop 4625.0
          %s2035 = vtos %v2034
          %s2036 = smul.f32 %s2018, %s2035
          %v2037 = vstv %s2036
          %v2038 = vrsqrt.pop %v2037
          %v2039 = vmul.f32 %v2037, %v2038
          %vm2040 = vcmp.eq.f32.partialorder %v2037, inf
          %v2041 = vsel %vm2040, %v2037, %v2039
          %vm2042 = vcmp.eq.f32.partialorder %v2037, 0.0
          %v2043 = vand.u32 %v2037, 2147483648
          %v2044 = vsel %vm2042, %v2043, %v2041
          %s2045 = vtos %v2044
          %s2046 = sadd.f32 %s2045, 1e-06
          %s2047 = smul.f32 %s2033, %s2033
          %v2048 = vstv %s2047
          %v2049 = vrcp.pop %v2048
          %s2050 = vtos %v2049
          %s2051 = smul.f32 %s2015, %s2050
          %s2052 = smul.f32 %s2020, 2.0
          %s2053 = smul.f32 %s2033, %s2046
          %v2054 = vstv %s2053
          %v2055 = vrcp.pop %v2054
          %s2056 = vtos %v2055
          %s2057 = smul.f32 %s2052, %s2056
          %s2058 = ssub.f32 %s2051, %s2057
          %s2059 = smul.f32 %s2046, %s2046
          %v2060 = vstv %s2059
          %v2061 = vrcp.pop %v2060
          %s2062 = vtos %v2061
          %s2063 = smul.f32 %s2018, %s2062
          %s2064 = sadd.f32 %s2058, %s2063
          %v2065 = vrcp.pop 4626.0
          %s2066 = vtos %v2065
          %s2067 = smul.f32 %s2064, %s2066
          %s2068 = scalar_lea.smem [#allocation7], 0
          %2069 = sst [smem:[%s2068]] %s2067
        $region48: #{spectrogram_loss.1} parent=31 // pred_fallthru
          _
        // Predicated region
        $region49: #{spectrogram_loss.1} parent=31 // pred_check
          %p2070 = pneg %p118
        $region50: #{spectrogram_loss.1} parent=31 // pred_check_branch
          %2072 = sbr.rel (%p2070) target = $region52
        $region51: #{spectrogram_loss.1} parent=31 // pred_region
          %s2074 = ssub.s32 16, 16
          %2075 = vsyncadd [#allocation6], %s2074
          %2078 = dma.smem_to_hbm [#allocation7], 16, %s3, [#allocation6]
        $region52: #{spectrogram_loss.1} parent=31 // pred_fallthru
          _
        // Predicated region
        $region53: #{spectrogram_loss.1} parent=31 // pred_check
          %p2079 = pneg %p118
        $region54: #{spectrogram_loss.1} parent=31 // pred_check_branch
          %2081 = sbr.rel (%p2079) target = $region56
        $region55: #{spectrogram_loss.1} parent=31 // pred_region
          %2082 = dma.done [#allocation6], 16
        $region56: #{spectrogram_loss.1} parent=31 // pred_fallthru
          _
        %2083 = sfence
      $region32: #{spectrogram_loss.1} parent=5 // pred_fallthru
        _
      %p2084 = scmp.le.s32.totalorder 2, %s11
      // Predicated region
      $region57: #{spectrogram_loss.1} parent=5 // pred_check
        %p2085 = pneg %p2084
      $region58: #{spectrogram_loss.1} parent=5 // pred_check_branch
        %2087 = sbr.rel (%p2085) target = $region60
      $region59: #{spectrogram_loss.1} parent=5 // pred_region
        %s2088 = ssub.s32 %s11, 2
      $region60: #{spectrogram_loss.1} parent=5 // pred_fallthru
        _
    $region6: #{spectrogram_loss.1} parent=1 // loop_footer
      %s15 = sadd.s32 1, %s11
    $region7: #{spectrogram_loss.1} parent=1 // loop_footer_branch
      %10 = sbr.rel target = $region3
    $region8: #{spectrogram_loss.1} parent=1 // loop_exit
      _
    %2089 = vsyncpa [#allocation5], 1
    %s2090 = scalar_lea.sflag [#allocation5], 1
    %2091 = vsyncpa %s2090, 1
    %2092 = vsyncpa [#allocation6], 1
    %s2093 = scalar_lea.sflag [#allocation6], 1
    %2094 = vsyncpa %s2093, 1

</llo_original>
